<compile_context>
chip_gen: v5e
topology: v5e:2x2
jax: 0.10.0
libtpu: 0.0.40
codegen_flags: <defaults>
</compile_context>

<pallas_src>
import functools

import jax
import jax.numpy as jnp
from jax.experimental import pallas as pl
from jax.experimental.pallas import tpu as pltpu


# ---------------------------------------------------------------------------
# Kernel: tiled aggregation  out[i] = dinv[i] * sum_k A[i,k] @ XW[k] + b
#   grid = (row tiles i, source tiles k); f32 VMEM accumulator;
#   init on k==0, finalize (dinv scale + bias + optional ReLU) on last k.
# ---------------------------------------------------------------------------
def _gcn_agg_kernel(a_ref, xw_ref, dinv_ref, b_ref, o_ref, acc_ref, *, relu):
    k = pl.program_id(1)

    @pl.when(k == 0)
    def _():
        acc_ref[...] = jnp.zeros_like(acc_ref)

    # int8 adjacency tile -> bf16 for the MXU (VPU cast hidden under the DMA),
    # f32 accumulation on the MXU.
    acc_ref[...] += jnp.dot(a_ref[...].astype(jnp.bfloat16), xw_ref[...],
                            preferred_element_type=jnp.float32)

    @pl.when(k == pl.num_programs(1) - 1)
    def _():
        out = acc_ref[...] * dinv_ref[...] + b_ref[...]   # rank-1 scale + bias, f32
        if relu:
            out = jnp.maximum(out, 0.0)
        o_ref[...] = out.astype(o_ref.dtype)


def gcn_aggregate(a_int8, xw, dinv, b, *, relu, out_dtype, tm=512, tk=512):
    """Tiled Pallas call for  dinv * (A_sl @ XW) + b  (optionally ReLU'd)."""
    n_pad = a_int8.shape[0]
    fout = xw.shape[1]
    ni, nk = n_pad // tm, n_pad // tk

    kernel = functools.partial(_gcn_agg_kernel, relu=relu)

    flops = 2 * n_pad * n_pad * fout
    bytes_accessed = (a_int8.size                                   # int8 A
                      + ni * xw.size * xw.dtype.itemsize            # XW re-stream
                      + ni * nk * tm * 4                            # dinv tiles
                      + b.size * 4
                      + n_pad * fout * jnp.dtype(out_dtype).itemsize)

    return pl.pallas_call(
        kernel,
        out_shape=jax.ShapeDtypeStruct((n_pad, fout), out_dtype),
        grid_spec=pltpu.PrefetchScalarGridSpec(
            num_scalar_prefetch=0,
            grid=(ni, nk),
            in_specs=[
                pl.BlockSpec((tm, tk), lambda i, k: (i, k)),     # A_sl row/col tile
                pl.BlockSpec((tk, fout), lambda i, k: (k, 0)),   # XW source tile
                pl.BlockSpec((tm, 1), lambda i, k: (i, 0)),      # dinv row tile
                pl.BlockSpec((1, fout), lambda i, k: (0, 0)),    # bias (resident)
            ],
            out_specs=pl.BlockSpec((tm, fout), lambda i, k: (i, 0)),
            scratch_shapes=[pltpu.VMEM((tm, fout), jnp.float32)],
        ),
        compiler_params=pltpu.CompilerParams(
            dimension_semantics=("parallel", "arbitrary")),
        cost_estimate=pl.CostEstimate(
            flops=flops, transcendentals=0, bytes_accessed=bytes_accessed),
    )(a_int8, xw, dinv, b)


# ---------------------------------------------------------------------------
# Plain-JAX glue: int8 self-looped adjacency + D^{-1/2}, parameter init
# ---------------------------------------------------------------------------
def build_adjacency(edge_index, num_nodes, n_pad):
    """Int8 A_sl[target, source] (duplicates accumulate; remaining self-loops
    added for real nodes) and dinv = D^{-1/2} as a (n_pad, 1) f32 column.

    Assumes < 128 duplicate copies of any single edge (int8 counts).
    """
    src, dst = edge_index[0], edge_index[1]

    # Single scatter into the pre-padded int8 buffer (message source -> target).
    a = jnp.zeros((n_pad, n_pad), jnp.int8).at[dst, src].add(
        jnp.ones(src.shape, jnp.int8))

    # add_remaining_self_loops: only for real nodes without an existing loop.
    self_edge = (src == dst).astype(jnp.int32)
    has_self = jnp.zeros((n_pad,), jnp.int32).at[dst].max(self_edge) > 0
    idx = jnp.arange(n_pad)
    valid = idx < num_nodes
    add_loop = jnp.where(valid & (~has_self), 1, 0)
    a = a.at[idx, idx].add(add_loop.astype(jnp.int8))

    # Degrees straight from the edge list (no N^2 row-sum pass).
    in_deg = jnp.zeros((n_pad,), jnp.int32).at[dst].add(1)
    deg = (in_deg + add_loop).astype(jnp.float32)
    dinv = jnp.where(deg > 0.0, jax.lax.rsqrt(deg), 0.0)
    return a, dinv[:, None]


def init_params(key, in_channels, out_channels):
    """Deterministic glorot-uniform weights, zero biases (PyG GCNConv init)."""
    hidden = 2 * out_channels
    k1, k2, k3 = jax.random.split(key, 3)

    def glorot(k, fan_in, fan_out):
        lim = jnp.sqrt(6.0 / (fan_in + fan_out))
        return jax.random.uniform(k, (fan_in, fan_out), jnp.float32, -lim, lim)

    w1 = glorot(k1, in_channels, hidden)
    b1 = jnp.zeros((1, hidden), jnp.float32)
    wmu = glorot(k2, hidden, out_channels)
    bmu = jnp.zeros((1, out_channels), jnp.float32)
    wls = glorot(k3, hidden, out_channels)
    bls = jnp.zeros((1, out_channels), jnp.float32)
    return (w1, b1, wmu, bmu, wls, bls)


def variational_gcn_encoder(x, edge_index, params, *, tile=512):
    """x: [N, in_c] f32; edge_index: [2, E] int32.  Returns (mu, logstd)."""
    w1, b1, wmu, bmu, wls, bls = params
    n, _ = x.shape
    out_c = wmu.shape[1]

    # Pad node dim to a multiple of the tile (on v7x pick tile so n_pad/tile is
    # even to feed both TensorCores; irrelevant at demo scale).
    n_pad = ((n + tile - 1) // tile) * tile
    a_i8, dinv = build_adjacency(edge_index, n, n_pad)

    x_pad = jnp.zeros((n_pad, x.shape[1]), jnp.float32).at[:n].set(
        x.astype(jnp.float32))

    # ---- conv1 + ReLU:  XW hoisted into a tiny XLA dot, kernel aggregates ----
    xw1 = ((x_pad * dinv) @ w1).astype(jnp.bfloat16)          # [n_pad, hidden]
    h = gcn_aggregate(a_i8, xw1, dinv, b1, relu=True,
                      out_dtype=jnp.float32, tm=tile, tk=tile)

    # ---- fused conv_mu | conv_logstd: one aggregation, one 128-wide store ----
    wcat = jnp.concatenate([wmu, wls], axis=1)                # [hidden, 2*out_c]
    bcat = jnp.concatenate([bmu, bls], axis=1)
    hw = ((h * dinv) @ wcat).astype(jnp.bfloat16)             # hoisted H @ Wcat
    out = gcn_aggregate(a_i8, hw, dinv, bcat, relu=False,
                        out_dtype=jnp.float32, tm=tile, tk=tile)

    mu = out[:n, :out_c]
    logstd = out[:n, out_c:2 * out_c]
    return mu, logstd


if __name__ == "__main__":
    N, in_c, out_c = 32, 16, 64          # hidden = 2 * out_c = 128
    key = jax.random.PRNGKey(0)
    kx, kp = jax.random.split(key)

    x = jax.random.normal(kx, (N, in_c), dtype=jnp.float32)

    # Deterministic small graph: bidirectional ring, edge_index shape [2, 2N]
    src = jnp.arange(N, dtype=jnp.int32)
    dst = (src + 1) % N
    edge_index = jnp.stack([jnp.concatenate([src, dst]),
                            jnp.concatenate([dst, src])], axis=0)

    params = init_params(kp, in_c, out_c)

    mu, logstd = variational_gcn_encoder(x, edge_index, params)
    jax.block_until_ready((mu, logstd))

    assert mu.shape == (N, out_c) and mu.dtype == jnp.float32
    assert logstd.shape == (N, out_c) and logstd.dtype == jnp.float32
    assert bool(jnp.all(jnp.isfinite(mu))) and bool(jnp.all(jnp.isfinite(logstd)))
    print("KERNEL_OK")
</pallas_src>

<mosaic_0001>
module attributes {stable_mosaic.version = 11 : i64} {
  func.func @_gcn_agg_kernel(%arg0: i32, %arg1: i32, %arg2: memref<512x512xi8, #tpu.memory_space<vmem>>, %arg3: memref<512x128xbf16, #tpu.memory_space<vmem>>, %arg4: memref<512x1xf32, #tpu.memory_space<vmem>>, %arg5: memref<1x128xf32, #tpu.memory_space<vmem>>, %arg6: memref<512x128xf32, #tpu.memory_space<vmem>>, %arg7: memref<512x128xf32, #tpu.memory_space<vmem>>) attributes {dimension_semantics = [#tpu.dimension_semantics<parallel>, #tpu.dimension_semantics<arbitrary>], iteration_bounds = array<i64: 1, 1>, scalar_prefetch = 0 : i64, scratch_operands = 1 : i64, tpu.core_type = #tpu.core_type<tc>, window_params = [{transform_indices = @transform_0, window_bounds = array<i64: 512, 512>}, {transform_indices = @transform_1, window_bounds = array<i64: 512, 128>}, {transform_indices = @transform_2, window_bounds = array<i64: 512, 1>}, {pipeline_mode = #tpu.pipeline_mode<synchronous>, transform_indices = @transform_3, window_bounds = array<i64: 1, 128>}, {transform_indices = @transform_4, window_bounds = array<i64: 512, 128>}]} {
    %c0_i32 = arith.constant 0 : i32
    %0 = arith.cmpi eq, %arg1, %c0_i32 : i32
    %1 = arith.extui %0 : i1 to i32
    %c0_i32_0 = arith.constant 0 : i32
    %2 = arith.cmpi ne, %1, %c0_i32_0 : i32
    scf.if %2 {
      %cst_10 = arith.constant 0.000000e+00 : f32
      %13 = vector.broadcast %cst_10 : f32 to vector<512x128xf32>
      %c0_11 = arith.constant 0 : index
      %c0_12 = arith.constant 0 : index
      %14 = vector.load %arg7[%c0_11, %c0_12] : memref<512x128xf32, #tpu.memory_space<vmem>>, vector<512x128xf32>
      tpu.vector_store %arg7[%c0_11, %c0_12], %13 {strides = array<i32>} : memref<512x128xf32, #tpu.memory_space<vmem>>, vector<512x128xf32>,
    } else {
    }
    %c0 = arith.constant 0 : index
    %c0_1 = arith.constant 0 : index
    %3 = vector.load %arg7[%c0, %c0_1] : memref<512x128xf32, #tpu.memory_space<vmem>>, vector<512x128xf32>
    %c0_2 = arith.constant 0 : index
    %c0_3 = arith.constant 0 : index
    %4 = vector.load %arg2[%c0_2, %c0_3] : memref<512x512xi8, #tpu.memory_space<vmem>>, vector<512x512xi8>
    %5 = arith.sitofp %4 : vector<512x512xi8> to vector<512x512xbf16>
    %c0_4 = arith.constant 0 : index
    %c0_5 = arith.constant 0 : index
    %6 = vector.load %arg3[%c0_4, %c0_5] : memref<512x128xbf16, #tpu.memory_space<vmem>>, vector<512x128xbf16>
    %cst = arith.constant dense<0.000000e+00> : vector<512x128xf32>
    %7 = tpu.matmul %5, %6, %cst {dimension_numbers = #tpu.dot_dimension_numbers<[1], [0], [0], [1], [0, 0, 1, 1], [], []>} : vector<512x512xbf16>, vector<512x128xbf16>, vector<512x128xf32> -> vector<512x128xf32>
    %8 = arith.addf %3, %7 : vector<512x128xf32>
    %c0_6 = arith.constant 0 : index
    %c0_7 = arith.constant 0 : index
    %9 = vector.load %arg7[%c0_6, %c0_7] : memref<512x128xf32, #tpu.memory_space<vmem>>, vector<512x128xf32>
    tpu.vector_store %arg7[%c0_6, %c0_7], %8 {strides = array<i32>} : memref<512x128xf32, #tpu.memory_space<vmem>>, vector<512x128xf32>,
    %c0_i32_8 = arith.constant 0 : i32
    %10 = arith.cmpi eq, %arg1, %c0_i32_8 : i32
    %11 = arith.extui %10 : i1 to i32
    %c0_i32_9 = arith.constant 0 : i32
    %12 = arith.cmpi ne, %11, %c0_i32_9 : i32
    scf.if %12 {
      %c0_10 = arith.constant 0 : index
      %c0_11 = arith.constant 0 : index
      %13 = vector.load %arg7[%c0_10, %c0_11] : memref<512x128xf32, #tpu.memory_space<vmem>>, vector<512x128xf32>
      %c0_12 = arith.constant 0 : index
      %c0_13 = arith.constant 0 : index
      %14 = vector.load %arg4[%c0_12, %c0_13] : memref<512x1xf32, #tpu.memory_space<vmem>>, vector<512x1xf32>
      %15 = vector.broadcast %14 : vector<512x1xf32> to vector<512x128xf32>
      %16 = arith.mulf %13, %15 : vector<512x128xf32>
      %c0_14 = arith.constant 0 : index
      %c0_15 = arith.constant 0 : index
      %17 = vector.load %arg5[%c0_14, %c0_15] : memref<1x128xf32, #tpu.memory_space<vmem>>, vector<1x128xf32>
      %18 = vector.broadcast %17 : vector<1x128xf32> to vector<512x128xf32>
      %19 = arith.addf %16, %18 : vector<512x128xf32>
      %cst_16 = arith.constant 0.000000e+00 : f32
      %20 = vector.broadcast %cst_16 : f32 to vector<512x128xf32>
      %21 = arith.maximumf %19, %20 : vector<512x128xf32>
      %c0_17 = arith.constant 0 : index
      %c0_18 = arith.constant 0 : index
      %22 = vector.load %arg6[%c0_17, %c0_18] : memref<512x128xf32, #tpu.memory_space<vmem>>, vector<512x128xf32>
      tpu.vector_store %arg6[%c0_17, %c0_18], %21 {strides = array<i32>} : memref<512x128xf32, #tpu.memory_space<vmem>>, vector<512x128xf32>,
    } else {
    }
    return
  }
  func.func @transform_0(%arg0: i32, %arg1: i32) -> (i32, i32) {
    %c0_i32 = arith.constant 0 : i32
    return %arg0, %arg1 : i32, i32
  }
  func.func @transform_1(%arg0: i32, %arg1: i32) -> (i32, i32) {
    %c0_i32 = arith.constant 0 : i32
    %c0_i32_0 = arith.constant 0 : i32
    return %arg1, %c0_i32 : i32, i32
  }
  func.func @transform_2(%arg0: i32, %arg1: i32) -> (i32, i32) {
    %c0_i32 = arith.constant 0 : i32
    %c0_i32_0 = arith.constant 0 : i32
    return %arg0, %c0_i32 : i32, i32
  }
  func.func @transform_3(%arg0: i32, %arg1: i32) -> (i32, i32) {
    %c0_i32 = arith.constant 0 : i32
    %c0_i32_0 = arith.constant 0 : i32
    %c0_i32_1 = arith.constant 0 : i32
    return %c0_i32, %c0_i32_0 : i32, i32
  }
  func.func @transform_4(%arg0: i32, %arg1: i32) -> (i32, i32) {
    %c0_i32 = arith.constant 0 : i32
    %c0_i32_0 = arith.constant 0 : i32
    return %arg0, %c0_i32 : i32, i32
  }
}

</mosaic_0001>

<llo_original>
// kernel: tpu_custom_call.1
$region0: #{tpu_custom_call.1}
  #allocation0 [shape = 'u32[]', space=smem, size = 0x4, offset = 0x4, fixed_abs, tag = 'smem constant byte address 0x4 - core index']
  #allocation1 [shape = 'u32[72,128]{1,0:T(1,128)}', space=vmem, size = 0x9000, scoped, tag = 'internal scratch']
  #allocation2 [shape = 'f32[512,128]{1,0:T(8,128)}', space=vmem, size = 0x40000, scoped, tag = 'scratch operand']
  %s0 = inlined_call_operand.vmem [shape: s8[512,512], index: 0, kind: input, shape index: {}]
  %s1 = inlined_call_operand.hbm [shape: bf16[512,128], index: 1, kind: input, shape index: {}]
  %s2 = inlined_call_operand.vmem [shape: f32[512,1], index: 2, kind: input, shape index: {}]
  %s3 = inlined_call_operand.vmem [shape: f32[1,128], index: 3, kind: input, shape index: {}]
  %s4 = inlined_call_operand.hbm [shape: f32[512,128], index: 4, kind: output, shape index: {}]
  %s5 = sld [smem:[#allocation0]]
  $region38: #{tpu_custom_call.1} parent=0
    _
  %s7 = ssub.s32 1, %s5
  %s8 = scalar_select 0, %s7, %s5
  $region1: #{tpu_custom_call.1} parent=0
    #allocation3 [shape = 'u8[131072]{0}', space=vmem, size = 0x20000, scoped, tag = 'input window, operand 1, single buffered']
    #allocation4 [shape = 's32[1]{0}', space=sflag, size = 0x4, scoped, tag = 'scoped memory for tpu_custom_call.1']
    #allocation5 [shape = 's32[1]{0}', space=sflag, size = 0x4, scoped, tag = 'scoped memory for tpu_custom_call.1']
    #allocation6 [shape = 'u8[262144]{0}', space=vmem, size = 0x40000, scoped, tag = 'output window, operand 0, single buffered']
    %9 = vsyncpa [#allocation4], 0
    %10 = vsyncpa [#allocation5], 0
    // Predicated region
    $region2: #{tpu_custom_call.1} parent=1 // pred_check
      _
    $region3: #{tpu_custom_call.1} parent=1 // pred_check_branch
      %12 = sbr.rel (0) target = $region5
    $region4: #{tpu_custom_call.1} parent=1 // pred_region
      _
    $region5: #{tpu_custom_call.1} parent=1 // pred_fallthru
      _
    // Predicated region
    $region6: #{tpu_custom_call.1} parent=1 // pred_check
      _
    $region7: #{tpu_custom_call.1} parent=1 // pred_check_branch
      %14 = sbr.rel (0) target = $region9
    $region8: #{tpu_custom_call.1} parent=1 // pred_region
      %16 = vsyncadd [#allocation4], 0
      %s17 = sshll.u32 %s1, 4
      %s18 = int_to_ptr.hbm [resolvable:$true] %s17
      %s19 = sshll.u32 [#allocation3], 4
      %s20 = int_to_ptr.vmem [resolvable:$true] %s19
      %25 = dma.hbm_to_vmem [thread:$0]  %s18, 4096, %s20, [#allocation4], 64, 64, 4
    $region9: #{tpu_custom_call.1} parent=1 // pred_fallthru
      _
    // Predicated region
    $region10: #{tpu_custom_call.1} parent=1 // pred_check
      _
    $region11: #{tpu_custom_call.1} parent=1 // pred_check_branch
      %27 = sbr.rel (0) target = $region13
    $region12: #{tpu_custom_call.1} parent=1 // pred_region
      _
    $region13: #{tpu_custom_call.1} parent=1 // pred_fallthru
      _
    // Predicated region
    $region14: #{tpu_custom_call.1} parent=1 // pred_check
      _
    $region15: #{tpu_custom_call.1} parent=1 // pred_check_branch
      %29 = sbr.rel (0) target = $region17
    $region16: #{tpu_custom_call.1} parent=1 // pred_region
      _
    $region17: #{tpu_custom_call.1} parent=1 // pred_fallthru
      _
    // Predicated region
    $region18: #{tpu_custom_call.1} parent=1 // pred_check
      _
    $region19: #{tpu_custom_call.1} parent=1 // pred_check_branch
      %31 = sbr.rel (0) target = $region21
    $region20: #{tpu_custom_call.1} parent=1 // pred_region
      %33 = dma.done [#allocation4], 4096
    $region21: #{tpu_custom_call.1} parent=1 // pred_fallthru
      _
    %p34 = scmp.eq.s32.totalorder 0, 0
    // Predicated region
    $region22: #{tpu_custom_call.1} parent=1 // pred_check
      %p35 = pneg %p34
    $region23: #{tpu_custom_call.1} parent=1 // pred_check_branch
      %37 = sbr.rel (%p35) target = $region25
    $region24: #{tpu_custom_call.1} parent=1 // pred_region
      %38 = vst [vmem:[#allocation2] sm:$0xff] 0.0
      %39 = vst [vmem:[#allocation2 + $0x8] sm:$0xff] 0.0
      %40 = vst [vmem:[#allocation2 + $0x10] sm:$0xff] 0.0
      %41 = vst [vmem:[#allocation2 + $0x18] sm:$0xff] 0.0
      %42 = vst [vmem:[#allocation2 + $0x20] sm:$0xff] 0.0
      %43 = vst [vmem:[#allocation2 + $0x28] sm:$0xff] 0.0
      %44 = vst [vmem:[#allocation2 + $0x30] sm:$0xff] 0.0
      %45 = vst [vmem:[#allocation2 + $0x38] sm:$0xff] 0.0
      %46 = vst [vmem:[#allocation2 + $0x40] sm:$0xff] 0.0
      %47 = vst [vmem:[#allocation2 + $0x48] sm:$0xff] 0.0
      %48 = vst [vmem:[#allocation2 + $0x50] sm:$0xff] 0.0
      %49 = vst [vmem:[#allocation2 + $0x58] sm:$0xff] 0.0
      %50 = vst [vmem:[#allocation2 + $0x60] sm:$0xff] 0.0
      %51 = vst [vmem:[#allocation2 + $0x68] sm:$0xff] 0.0
      %52 = vst [vmem:[#allocation2 + $0x70] sm:$0xff] 0.0
      %53 = vst [vmem:[#allocation2 + $0x78] sm:$0xff] 0.0
      %54 = vst [vmem:[#allocation2 + $0x80] sm:$0xff] 0.0
      %55 = vst [vmem:[#allocation2 + $0x88] sm:$0xff] 0.0
      %56 = vst [vmem:[#allocation2 + $0x90] sm:$0xff] 0.0
      %57 = vst [vmem:[#allocation2 + $0x98] sm:$0xff] 0.0
      %58 = vst [vmem:[#allocation2 + $0xa0] sm:$0xff] 0.0
      %59 = vst [vmem:[#allocation2 + $0xa8] sm:$0xff] 0.0
      %60 = vst [vmem:[#allocation2 + $0xb0] sm:$0xff] 0.0
      %61 = vst [vmem:[#allocation2 + $0xb8] sm:$0xff] 0.0
      %62 = vst [vmem:[#allocation2 + $0xc0] sm:$0xff] 0.0
      %63 = vst [vmem:[#allocation2 + $0xc8] sm:$0xff] 0.0
      %64 = vst [vmem:[#allocation2 + $0xd0] sm:$0xff] 0.0
      %65 = vst [vmem:[#allocation2 + $0xd8] sm:$0xff] 0.0
      %66 = vst [vmem:[#allocation2 + $0xe0] sm:$0xff] 0.0
      %67 = vst [vmem:[#allocation2 + $0xe8] sm:$0xff] 0.0
      %68 = vst [vmem:[#allocation2 + $0xf0] sm:$0xff] 0.0
      %69 = vst [vmem:[#allocation2 + $0xf8] sm:$0xff] 0.0
      %70 = vst [vmem:[#allocation2 + $0x100] sm:$0xff] 0.0
      %71 = vst [vmem:[#allocation2 + $0x108] sm:$0xff] 0.0
      %72 = vst [vmem:[#allocation2 + $0x110] sm:$0xff] 0.0
      %73 = vst [vmem:[#allocation2 + $0x118] sm:$0xff] 0.0
      %74 = vst [vmem:[#allocation2 + $0x120] sm:$0xff] 0.0
      %75 = vst [vmem:[#allocation2 + $0x128] sm:$0xff] 0.0
      %76 = vst [vmem:[#allocation2 + $0x130] sm:$0xff] 0.0
      %77 = vst [vmem:[#allocation2 + $0x138] sm:$0xff] 0.0
      %78 = vst [vmem:[#allocation2 + $0x140] sm:$0xff] 0.0
      %79 = vst [vmem:[#allocation2 + $0x148] sm:$0xff] 0.0
      %80 = vst [vmem:[#allocation2 + $0x150] sm:$0xff] 0.0
      %81 = vst [vmem:[#allocation2 + $0x158] sm:$0xff] 0.0
      %82 = vst [vmem:[#allocation2 + $0x160] sm:$0xff] 0.0
      %83 = vst [vmem:[#allocation2 + $0x168] sm:$0xff] 0.0
      %84 = vst [vmem:[#allocation2 + $0x170] sm:$0xff] 0.0
      %85 = vst [vmem:[#allocation2 + $0x178] sm:$0xff] 0.0
      %86 = vst [vmem:[#allocation2 + $0x180] sm:$0xff] 0.0
      %87 = vst [vmem:[#allocation2 + $0x188] sm:$0xff] 0.0
      %88 = vst [vmem:[#allocation2 + $0x190] sm:$0xff] 0.0
      %89 = vst [vmem:[#allocation2 + $0x198] sm:$0xff] 0.0
      %90 = vst [vmem:[#allocation2 + $0x1a0] sm:$0xff] 0.0
      %91 = vst [vmem:[#allocation2 + $0x1a8] sm:$0xff] 0.0
      %92 = vst [vmem:[#allocation2 + $0x1b0] sm:$0xff] 0.0
      %93 = vst [vmem:[#allocation2 + $0x1b8] sm:$0xff] 0.0
      %94 = vst [vmem:[#allocation2 + $0x1c0] sm:$0xff] 0.0
      %95 = vst [vmem:[#allocation2 + $0x1c8] sm:$0xff] 0.0
      %96 = vst [vmem:[#allocation2 + $0x1d0] sm:$0xff] 0.0
      %97 = vst [vmem:[#allocation2 + $0x1d8] sm:$0xff] 0.0
      %98 = vst [vmem:[#allocation2 + $0x1e0] sm:$0xff] 0.0
      %99 = vst [vmem:[#allocation2 + $0x1e8] sm:$0xff] 0.0
      %100 = vst [vmem:[#allocation2 + $0x1f0] sm:$0xff] 0.0
      %101 = vst [vmem:[#allocation2 + $0x1f8] sm:$0xff] 0.0
    $region25: #{tpu_custom_call.1} parent=1 // pred_fallthru
      _
    %v102 = vld [vmem:[#allocation2] sm:$0xff]
    %v103 = vld [vmem:[#allocation2 + $0x8] sm:$0xff]
    %v104 = vld [vmem:[#allocation2 + $0x10] sm:$0xff]
    %v105 = vld [vmem:[#allocation2 + $0x18] sm:$0xff]
    %v106 = vld [vmem:[#allocation2 + $0x20] sm:$0xff]
    %v107 = vld [vmem:[#allocation2 + $0x28] sm:$0xff]
    %v108 = vld [vmem:[#allocation2 + $0x30] sm:$0xff]
    %v109 = vld [vmem:[#allocation2 + $0x38] sm:$0xff]
    %v110 = vld [vmem:[#allocation2 + $0x40] sm:$0xff]
    %v111 = vld [vmem:[#allocation2 + $0x48] sm:$0xff]
    %v112 = vld [vmem:[#allocation2 + $0x50] sm:$0xff]
    %v113 = vld [vmem:[#allocation2 + $0x58] sm:$0xff]
    %v114 = vld [vmem:[#allocation2 + $0x60] sm:$0xff]
    %v115 = vld [vmem:[#allocation2 + $0x68] sm:$0xff]
    %v116 = vld [vmem:[#allocation2 + $0x70] sm:$0xff]
    %v117 = vld [vmem:[#allocation2 + $0x78] sm:$0xff]
    %v118 = vld [vmem:[#allocation2 + $0x80] sm:$0xff]
    %v119 = vld [vmem:[#allocation2 + $0x88] sm:$0xff]
    %v120 = vld [vmem:[#allocation2 + $0x90] sm:$0xff]
    %v121 = vld [vmem:[#allocation2 + $0x98] sm:$0xff]
    %v122 = vld [vmem:[#allocation2 + $0xa0] sm:$0xff]
    %v123 = vld [vmem:[#allocation2 + $0xa8] sm:$0xff]
    %v124 = vld [vmem:[#allocation2 + $0xb0] sm:$0xff]
    %v125 = vld [vmem:[#allocation2 + $0xb8] sm:$0xff]
    %v126 = vld [vmem:[#allocation2 + $0xc0] sm:$0xff]
    %v127 = vld [vmem:[#allocation2 + $0xc8] sm:$0xff]
    %v128 = vld [vmem:[#allocation2 + $0xd0] sm:$0xff]
    %v129 = vld [vmem:[#allocation2 + $0xd8] sm:$0xff]
    %v130 = vld [vmem:[#allocation2 + $0xe0] sm:$0xff]
    %v131 = vld [vmem:[#allocation2 + $0xe8] sm:$0xff]
    %v132 = vld [vmem:[#allocation2 + $0xf0] sm:$0xff]
    %v133 = vld [vmem:[#allocation2 + $0xf8] sm:$0xff]
    %v134 = vld [vmem:[#allocation2 + $0x100] sm:$0xff]
    %v135 = vld [vmem:[#allocation2 + $0x108] sm:$0xff]
    %v136 = vld [vmem:[#allocation2 + $0x110] sm:$0xff]
    %v137 = vld [vmem:[#allocation2 + $0x118] sm:$0xff]
    %v138 = vld [vmem:[#allocation2 + $0x120] sm:$0xff]
    %v139 = vld [vmem:[#allocation2 + $0x128] sm:$0xff]
    %v140 = vld [vmem:[#allocation2 + $0x130] sm:$0xff]
    %v141 = vld [vmem:[#allocation2 + $0x138] sm:$0xff]
    %v142 = vld [vmem:[#allocation2 + $0x140] sm:$0xff]
    %v143 = vld [vmem:[#allocation2 + $0x148] sm:$0xff]
    %v144 = vld [vmem:[#allocation2 + $0x150] sm:$0xff]
    %v145 = vld [vmem:[#allocation2 + $0x158] sm:$0xff]
    %v146 = vld [vmem:[#allocation2 + $0x160] sm:$0xff]
    %v147 = vld [vmem:[#allocation2 + $0x168] sm:$0xff]
    %v148 = vld [vmem:[#allocation2 + $0x170] sm:$0xff]
    %v149 = vld [vmem:[#allocation2 + $0x178] sm:$0xff]
    %v150 = vld [vmem:[#allocation2 + $0x180] sm:$0xff]
    %v151 = vld [vmem:[#allocation2 + $0x188] sm:$0xff]
    %v152 = vld [vmem:[#allocation2 + $0x190] sm:$0xff]
    %v153 = vld [vmem:[#allocation2 + $0x198] sm:$0xff]
    %v154 = vld [vmem:[#allocation2 + $0x1a0] sm:$0xff]
    %v155 = vld [vmem:[#allocation2 + $0x1a8] sm:$0xff]
    %v156 = vld [vmem:[#allocation2 + $0x1b0] sm:$0xff]
    %v157 = vld [vmem:[#allocation2 + $0x1b8] sm:$0xff]
    %v158 = vld [vmem:[#allocation2 + $0x1c0] sm:$0xff]
    %v159 = vld [vmem:[#allocation2 + $0x1c8] sm:$0xff]
    %v160 = vld [vmem:[#allocation2 + $0x1d0] sm:$0xff]
    %v161 = vld [vmem:[#allocation2 + $0x1d8] sm:$0xff]
    %v162 = vld [vmem:[#allocation2 + $0x1e0] sm:$0xff]
    %v163 = vld [vmem:[#allocation2 + $0x1e8] sm:$0xff]
    %v164 = vld [vmem:[#allocation2 + $0x1f0] sm:$0xff]
    %v165 = vld [vmem:[#allocation2 + $0x1f8] sm:$0xff]
    %v166 = vld [vmem:[%s0] sm:$0xff]
    %v167 = vld [vmem:[%s0 + $0x8] sm:$0xff]
    %v168 = vld [vmem:[%s0 + $0x10] sm:$0xff]
    %v169 = vld [vmem:[%s0 + $0x18] sm:$0xff]
    %v170 = vld [vmem:[%s0 + $0x20] sm:$0xff]
    %v171 = vld [vmem:[%s0 + $0x28] sm:$0xff]
    %v172 = vld [vmem:[%s0 + $0x30] sm:$0xff]
    %v173 = vld [vmem:[%s0 + $0x38] sm:$0xff]
    %v174 = vld [vmem:[%s0 + $0x40] sm:$0xff]
    %v175 = vld [vmem:[%s0 + $0x48] sm:$0xff]
    %v176 = vld [vmem:[%s0 + $0x50] sm:$0xff]
    %v177 = vld [vmem:[%s0 + $0x58] sm:$0xff]
    %v178 = vld [vmem:[%s0 + $0x60] sm:$0xff]
    %v179 = vld [vmem:[%s0 + $0x68] sm:$0xff]
    %v180 = vld [vmem:[%s0 + $0x70] sm:$0xff]
    %v181 = vld [vmem:[%s0 + $0x78] sm:$0xff]
    %v182 = vld [vmem:[%s0 + $0x80] sm:$0xff]
    %v183 = vld [vmem:[%s0 + $0x88] sm:$0xff]
    %v184 = vld [vmem:[%s0 + $0x90] sm:$0xff]
    %v185 = vld [vmem:[%s0 + $0x98] sm:$0xff]
    %v186 = vld [vmem:[%s0 + $0xa0] sm:$0xff]
    %v187 = vld [vmem:[%s0 + $0xa8] sm:$0xff]
    %v188 = vld [vmem:[%s0 + $0xb0] sm:$0xff]
    %v189 = vld [vmem:[%s0 + $0xb8] sm:$0xff]
    %v190 = vld [vmem:[%s0 + $0xc0] sm:$0xff]
    %v191 = vld [vmem:[%s0 + $0xc8] sm:$0xff]
    %v192 = vld [vmem:[%s0 + $0xd0] sm:$0xff]
    %v193 = vld [vmem:[%s0 + $0xd8] sm:$0xff]
    %v194 = vld [vmem:[%s0 + $0xe0] sm:$0xff]
    %v195 = vld [vmem:[%s0 + $0xe8] sm:$0xff]
    %v196 = vld [vmem:[%s0 + $0xf0] sm:$0xff]
    %v197 = vld [vmem:[%s0 + $0xf8] sm:$0xff]
    %v198 = vld [vmem:[%s0 + $0x100] sm:$0xff]
    %v199 = vld [vmem:[%s0 + $0x108] sm:$0xff]
    %v200 = vld [vmem:[%s0 + $0x110] sm:$0xff]
    %v201 = vld [vmem:[%s0 + $0x118] sm:$0xff]
    %v202 = vld [vmem:[%s0 + $0x120] sm:$0xff]
    %v203 = vld [vmem:[%s0 + $0x128] sm:$0xff]
    %v204 = vld [vmem:[%s0 + $0x130] sm:$0xff]
    %v205 = vld [vmem:[%s0 + $0x138] sm:$0xff]
    %v206 = vld [vmem:[%s0 + $0x140] sm:$0xff]
    %v207 = vld [vmem:[%s0 + $0x148] sm:$0xff]
    %v208 = vld [vmem:[%s0 + $0x150] sm:$0xff]
    %v209 = vld [vmem:[%s0 + $0x158] sm:$0xff]
    %v210 = vld [vmem:[%s0 + $0x160] sm:$0xff]
    %v211 = vld [vmem:[%s0 + $0x168] sm:$0xff]
    %v212 = vld [vmem:[%s0 + $0x170] sm:$0xff]
    %v213 = vld [vmem:[%s0 + $0x178] sm:$0xff]
    %v214 = vld [vmem:[%s0 + $0x180] sm:$0xff]
    %v215 = vld [vmem:[%s0 + $0x188] sm:$0xff]
    %v216 = vld [vmem:[%s0 + $0x190] sm:$0xff]
    %v217 = vld [vmem:[%s0 + $0x198] sm:$0xff]
    %v218 = vld [vmem:[%s0 + $0x1a0] sm:$0xff]
    %v219 = vld [vmem:[%s0 + $0x1a8] sm:$0xff]
    %v220 = vld [vmem:[%s0 + $0x1b0] sm:$0xff]
    %v221 = vld [vmem:[%s0 + $0x1b8] sm:$0xff]
    %v222 = vld [vmem:[%s0 + $0x1c0] sm:$0xff]
    %v223 = vld [vmem:[%s0 + $0x1c8] sm:$0xff]
    %v224 = vld [vmem:[%s0 + $0x1d0] sm:$0xff]
    %v225 = vld [vmem:[%s0 + $0x1d8] sm:$0xff]
    %v226 = vld [vmem:[%s0 + $0x1e0] sm:$0xff]
    %v227 = vld [vmem:[%s0 + $0x1e8] sm:$0xff]
    %v228 = vld [vmem:[%s0 + $0x1f0] sm:$0xff]
    %v229 = vld [vmem:[%s0 + $0x1f8] sm:$0xff]
    %v230 = vunpack.c.0.s8 %v166
    %v231 = vunpack.c.0.s8 %v167
    %v232 = vunpack.c.0.s8 %v168
    %v233 = vunpack.c.0.s8 %v169
    %v234 = vunpack.c.1.s8 %v166
    %v235 = vunpack.c.1.s8 %v167
    %v236 = vunpack.c.1.s8 %v168
    %v237 = vunpack.c.1.s8 %v169
    %v238 = vunpack.c.2.s8 %v166
    %v239 = vunpack.c.2.s8 %v167
    %v240 = vunpack.c.2.s8 %v168
    %v241 = vunpack.c.2.s8 %v169
    %v242 = vunpack.c.3.s8 %v166
    %v243 = vunpack.c.3.s8 %v167
    %v244 = vunpack.c.3.s8 %v168
    %v245 = vunpack.c.3.s8 %v169
    %v246 = vunpack.c.0.s8 %v170
    %v247 = vunpack.c.0.s8 %v171
    %v248 = vunpack.c.0.s8 %v172
    %v249 = vunpack.c.0.s8 %v173
    %v250 = vunpack.c.1.s8 %v170
    %v251 = vunpack.c.1.s8 %v171
    %v252 = vunpack.c.1.s8 %v172
    %v253 = vunpack.c.1.s8 %v173
    %v254 = vunpack.c.2.s8 %v170
    %v255 = vunpack.c.2.s8 %v171
    %v256 = vunpack.c.2.s8 %v172
    %v257 = vunpack.c.2.s8 %v173
    %v258 = vunpack.c.3.s8 %v170
    %v259 = vunpack.c.3.s8 %v171
    %v260 = vunpack.c.3.s8 %v172
    %v261 = vunpack.c.3.s8 %v173
    %v262 = vunpack.c.0.s8 %v174
    %v263 = vunpack.c.0.s8 %v175
    %v264 = vunpack.c.0.s8 %v176
    %v265 = vunpack.c.0.s8 %v177
    %v266 = vunpack.c.1.s8 %v174
    %v267 = vunpack.c.1.s8 %v175
    %v268 = vunpack.c.1.s8 %v176
    %v269 = vunpack.c.1.s8 %v177
    %v270 = vunpack.c.2.s8 %v174
    %v271 = vunpack.c.2.s8 %v175
    %v272 = vunpack.c.2.s8 %v176
    %v273 = vunpack.c.2.s8 %v177
    %v274 = vunpack.c.3.s8 %v174
    %v275 = vunpack.c.3.s8 %v175
    %v276 = vunpack.c.3.s8 %v176
    %v277 = vunpack.c.3.s8 %v177
    %v278 = vunpack.c.0.s8 %v178
    %v279 = vunpack.c.0.s8 %v179
    %v280 = vunpack.c.0.s8 %v180
    %v281 = vunpack.c.0.s8 %v181
    %v282 = vunpack.c.1.s8 %v178
    %v283 = vunpack.c.1.s8 %v179
    %v284 = vunpack.c.1.s8 %v180
    %v285 = vunpack.c.1.s8 %v181
    %v286 = vunpack.c.2.s8 %v178
    %v287 = vunpack.c.2.s8 %v179
    %v288 = vunpack.c.2.s8 %v180
    %v289 = vunpack.c.2.s8 %v181
    %v290 = vunpack.c.3.s8 %v178
    %v291 = vunpack.c.3.s8 %v179
    %v292 = vunpack.c.3.s8 %v180
    %v293 = vunpack.c.3.s8 %v181
    %v294 = vunpack.c.0.s8 %v182
    %v295 = vunpack.c.0.s8 %v183
    %v296 = vunpack.c.0.s8 %v184
    %v297 = vunpack.c.0.s8 %v185
    %v298 = vunpack.c.1.s8 %v182
    %v299 = vunpack.c.1.s8 %v183
    %v300 = vunpack.c.1.s8 %v184
    %v301 = vunpack.c.1.s8 %v185
    %v302 = vunpack.c.2.s8 %v182
    %v303 = vunpack.c.2.s8 %v183
    %v304 = vunpack.c.2.s8 %v184
    %v305 = vunpack.c.2.s8 %v185
    %v306 = vunpack.c.3.s8 %v182
    %v307 = vunpack.c.3.s8 %v183
    %v308 = vunpack.c.3.s8 %v184
    %v309 = vunpack.c.3.s8 %v185
    %v310 = vunpack.c.0.s8 %v186
    %v311 = vunpack.c.0.s8 %v187
    %v312 = vunpack.c.0.s8 %v188
    %v313 = vunpack.c.0.s8 %v189
    %v314 = vunpack.c.1.s8 %v186
    %v315 = vunpack.c.1.s8 %v187
    %v316 = vunpack.c.1.s8 %v188
    %v317 = vunpack.c.1.s8 %v189
    %v318 = vunpack.c.2.s8 %v186
    %v319 = vunpack.c.2.s8 %v187
    %v320 = vunpack.c.2.s8 %v188
    %v321 = vunpack.c.2.s8 %v189
    %v322 = vunpack.c.3.s8 %v186
    %v323 = vunpack.c.3.s8 %v187
    %v324 = vunpack.c.3.s8 %v188
    %v325 = vunpack.c.3.s8 %v189
    %v326 = vunpack.c.0.s8 %v190
    %v327 = vunpack.c.0.s8 %v191
    %v328 = vunpack.c.0.s8 %v192
    %v329 = vunpack.c.0.s8 %v193
    %v330 = vunpack.c.1.s8 %v190
    %v331 = vunpack.c.1.s8 %v191
    %v332 = vunpack.c.1.s8 %v192
    %v333 = vunpack.c.1.s8 %v193
    %v334 = vunpack.c.2.s8 %v190
    %v335 = vunpack.c.2.s8 %v191
    %v336 = vunpack.c.2.s8 %v192
    %v337 = vunpack.c.2.s8 %v193
    %v338 = vunpack.c.3.s8 %v190
    %v339 = vunpack.c.3.s8 %v191
    %v340 = vunpack.c.3.s8 %v192
    %v341 = vunpack.c.3.s8 %v193
    %v342 = vunpack.c.0.s8 %v194
    %v343 = vunpack.c.0.s8 %v195
    %v344 = vunpack.c.0.s8 %v196
    %v345 = vunpack.c.0.s8 %v197
    %v346 = vunpack.c.1.s8 %v194
    %v347 = vunpack.c.1.s8 %v195
    %v348 = vunpack.c.1.s8 %v196
    %v349 = vunpack.c.1.s8 %v197
    %v350 = vunpack.c.2.s8 %v194
    %v351 = vunpack.c.2.s8 %v195
    %v352 = vunpack.c.2.s8 %v196
    %v353 = vunpack.c.2.s8 %v197
    %v354 = vunpack.c.3.s8 %v194
    %v355 = vunpack.c.3.s8 %v195
    %v356 = vunpack.c.3.s8 %v196
    %v357 = vunpack.c.3.s8 %v197
    %v358 = vunpack.c.0.s8 %v198
    %v359 = vunpack.c.0.s8 %v199
    %v360 = vunpack.c.0.s8 %v200
    %v361 = vunpack.c.0.s8 %v201
    %v362 = vunpack.c.1.s8 %v198
    %v363 = vunpack.c.1.s8 %v199
    %v364 = vunpack.c.1.s8 %v200
    %v365 = vunpack.c.1.s8 %v201
    %v366 = vunpack.c.2.s8 %v198
    %v367 = vunpack.c.2.s8 %v199
    %v368 = vunpack.c.2.s8 %v200
    %v369 = vunpack.c.2.s8 %v201
    %v370 = vunpack.c.3.s8 %v198
    %v371 = vunpack.c.3.s8 %v199
    %v372 = vunpack.c.3.s8 %v200
    %v373 = vunpack.c.3.s8 %v201
    %v374 = vunpack.c.0.s8 %v202
    %v375 = vunpack.c.0.s8 %v203
    %v376 = vunpack.c.0.s8 %v204
    %v377 = vunpack.c.0.s8 %v205
    %v378 = vunpack.c.1.s8 %v202
    %v379 = vunpack.c.1.s8 %v203
    %v380 = vunpack.c.1.s8 %v204
    %v381 = vunpack.c.1.s8 %v205
    %v382 = vunpack.c.2.s8 %v202
    %v383 = vunpack.c.2.s8 %v203
    %v384 = vunpack.c.2.s8 %v204
    %v385 = vunpack.c.2.s8 %v205
    %v386 = vunpack.c.3.s8 %v202
    %v387 = vunpack.c.3.s8 %v203
    %v388 = vunpack.c.3.s8 %v204
    %v389 = vunpack.c.3.s8 %v205
    %v390 = vunpack.c.0.s8 %v206
    %v391 = vunpack.c.0.s8 %v207
    %v392 = vunpack.c.0.s8 %v208
    %v393 = vunpack.c.0.s8 %v209
    %v394 = vunpack.c.1.s8 %v206
    %v395 = vunpack.c.1.s8 %v207
    %v396 = vunpack.c.1.s8 %v208
    %v397 = vunpack.c.1.s8 %v209
    %v398 = vunpack.c.2.s8 %v206
    %v399 = vunpack.c.2.s8 %v207
    %v400 = vunpack.c.2.s8 %v208
    %v401 = vunpack.c.2.s8 %v209
    %v402 = vunpack.c.3.s8 %v206
    %v403 = vunpack.c.3.s8 %v207
    %v404 = vunpack.c.3.s8 %v208
    %v405 = vunpack.c.3.s8 %v209
    %v406 = vunpack.c.0.s8 %v210
    %v407 = vunpack.c.0.s8 %v211
    %v408 = vunpack.c.0.s8 %v212
    %v409 = vunpack.c.0.s8 %v213
    %v410 = vunpack.c.1.s8 %v210
    %v411 = vunpack.c.1.s8 %v211
    %v412 = vunpack.c.1.s8 %v212
    %v413 = vunpack.c.1.s8 %v213
    %v414 = vunpack.c.2.s8 %v210
    %v415 = vunpack.c.2.s8 %v211
    %v416 = vunpack.c.2.s8 %v212
    %v417 = vunpack.c.2.s8 %v213
    %v418 = vunpack.c.3.s8 %v210
    %v419 = vunpack.c.3.s8 %v211
    %v420 = vunpack.c.3.s8 %v212
    %v421 = vunpack.c.3.s8 %v213
    %v422 = vunpack.c.0.s8 %v214
    %v423 = vunpack.c.0.s8 %v215
    %v424 = vunpack.c.0.s8 %v216
    %v425 = vunpack.c.0.s8 %v217
    %v426 = vunpack.c.1.s8 %v214
    %v427 = vunpack.c.1.s8 %v215
    %v428 = vunpack.c.1.s8 %v216
    %v429 = vunpack.c.1.s8 %v217
    %v430 = vunpack.c.2.s8 %v214
    %v431 = vunpack.c.2.s8 %v215
    %v432 = vunpack.c.2.s8 %v216
    %v433 = vunpack.c.2.s8 %v217
    %v434 = vunpack.c.3.s8 %v214
    %v435 = vunpack.c.3.s8 %v215
    %v436 = vunpack.c.3.s8 %v216
    %v437 = vunpack.c.3.s8 %v217
    %v438 = vunpack.c.0.s8 %v218
    %v439 = vunpack.c.0.s8 %v219
    %v440 = vunpack.c.0.s8 %v220
    %v441 = vunpack.c.0.s8 %v221
    %v442 = vunpack.c.1.s8 %v218
    %v443 = vunpack.c.1.s8 %v219
    %v444 = vunpack.c.1.s8 %v220
    %v445 = vunpack.c.1.s8 %v221
    %v446 = vunpack.c.2.s8 %v218
    %v447 = vunpack.c.2.s8 %v219
    %v448 = vunpack.c.2.s8 %v220
    %v449 = vunpack.c.2.s8 %v221
    %v450 = vunpack.c.3.s8 %v218
    %v451 = vunpack.c.3.s8 %v219
    %v452 = vunpack.c.3.s8 %v220
    %v453 = vunpack.c.3.s8 %v221
    %v454 = vunpack.c.0.s8 %v222
    %v455 = vunpack.c.0.s8 %v223
    %v456 = vunpack.c.0.s8 %v224
    %v457 = vunpack.c.0.s8 %v225
    %v458 = vunpack.c.1.s8 %v222
    %v459 = vunpack.c.1.s8 %v223
    %v460 = vunpack.c.1.s8 %v224
    %v461 = vunpack.c.1.s8 %v225
    %v462 = vunpack.c.2.s8 %v222
    %v463 = vunpack.c.2.s8 %v223
    %v464 = vunpack.c.2.s8 %v224
    %v465 = vunpack.c.2.s8 %v225
    %v466 = vunpack.c.3.s8 %v222
    %v467 = vunpack.c.3.s8 %v223
    %v468 = vunpack.c.3.s8 %v224
    %v469 = vunpack.c.3.s8 %v225
    %v470 = vunpack.c.0.s8 %v226
    %v471 = vunpack.c.0.s8 %v227
    %v472 = vunpack.c.0.s8 %v228
    %v473 = vunpack.c.0.s8 %v229
    %v474 = vunpack.c.1.s8 %v226
    %v475 = vunpack.c.1.s8 %v227
    %v476 = vunpack.c.1.s8 %v228
    %v477 = vunpack.c.1.s8 %v229
    %v478 = vunpack.c.2.s8 %v226
    %v479 = vunpack.c.2.s8 %v227
    %v480 = vunpack.c.2.s8 %v228
    %v481 = vunpack.c.2.s8 %v229
    %v482 = vunpack.c.3.s8 %v226
    %v483 = vunpack.c.3.s8 %v227
    %v484 = vunpack.c.3.s8 %v228
    %v485 = vunpack.c.3.s8 %v229
    %v486 = vcvt.s32.f32 %v230
    %v487 = vcvt.s32.f32 %v231
    %v488 = vcvt.s32.f32 %v232
    %v489 = vcvt.s32.f32 %v233
    %v490 = vcvt.s32.f32 %v234
    %v491 = vcvt.s32.f32 %v235
    %v492 = vcvt.s32.f32 %v236
    %v493 = vcvt.s32.f32 %v237
    %v494 = vcvt.s32.f32 %v238
    %v495 = vcvt.s32.f32 %v239
    %v496 = vcvt.s32.f32 %v240
    %v497 = vcvt.s32.f32 %v241
    %v498 = vcvt.s32.f32 %v242
    %v499 = vcvt.s32.f32 %v243
    %v500 = vcvt.s32.f32 %v244
    %v501 = vcvt.s32.f32 %v245
    %v502 = vcvt.s32.f32 %v246
    %v503 = vcvt.s32.f32 %v247
    %v504 = vcvt.s32.f32 %v248
    %v505 = vcvt.s32.f32 %v249
    %v506 = vcvt.s32.f32 %v250
    %v507 = vcvt.s32.f32 %v251
    %v508 = vcvt.s32.f32 %v252
    %v509 = vcvt.s32.f32 %v253
    %v510 = vcvt.s32.f32 %v254
    %v511 = vcvt.s32.f32 %v255
    %v512 = vcvt.s32.f32 %v256
    %v513 = vcvt.s32.f32 %v257
    %v514 = vcvt.s32.f32 %v258
    %v515 = vcvt.s32.f32 %v259
    %v516 = vcvt.s32.f32 %v260
    %v517 = vcvt.s32.f32 %v261
    %v518 = vcvt.s32.f32 %v262
    %v519 = vcvt.s32.f32 %v263
    %v520 = vcvt.s32.f32 %v264
    %v521 = vcvt.s32.f32 %v265
    %v522 = vcvt.s32.f32 %v266
    %v523 = vcvt.s32.f32 %v267
    %v524 = vcvt.s32.f32 %v268
    %v525 = vcvt.s32.f32 %v269
    %v526 = vcvt.s32.f32 %v270
    %v527 = vcvt.s32.f32 %v271
    %v528 = vcvt.s32.f32 %v272
    %v529 = vcvt.s32.f32 %v273
    %v530 = vcvt.s32.f32 %v274
    %v531 = vcvt.s32.f32 %v275
    %v532 = vcvt.s32.f32 %v276
    %v533 = vcvt.s32.f32 %v277
    %v534 = vcvt.s32.f32 %v278
    %v535 = vcvt.s32.f32 %v279
    %v536 = vcvt.s32.f32 %v280
    %v537 = vcvt.s32.f32 %v281
    %v538 = vcvt.s32.f32 %v282
    %v539 = vcvt.s32.f32 %v283
    %v540 = vcvt.s32.f32 %v284
    %v541 = vcvt.s32.f32 %v285
    %v542 = vcvt.s32.f32 %v286
    %v543 = vcvt.s32.f32 %v287
    %v544 = vcvt.s32.f32 %v288
    %v545 = vcvt.s32.f32 %v289
    %v546 = vcvt.s32.f32 %v290
    %v547 = vcvt.s32.f32 %v291
    %v548 = vcvt.s32.f32 %v292
    %v549 = vcvt.s32.f32 %v293
    %v550 = vcvt.s32.f32 %v294
    %v551 = vcvt.s32.f32 %v295
    %v552 = vcvt.s32.f32 %v296
    %v553 = vcvt.s32.f32 %v297
    %v554 = vcvt.s32.f32 %v298
    %v555 = vcvt.s32.f32 %v299
    %v556 = vcvt.s32.f32 %v300
    %v557 = vcvt.s32.f32 %v301
    %v558 = vcvt.s32.f32 %v302
    %v559 = vcvt.s32.f32 %v303
    %v560 = vcvt.s32.f32 %v304
    %v561 = vcvt.s32.f32 %v305
    %v562 = vcvt.s32.f32 %v306
    %v563 = vcvt.s32.f32 %v307
    %v564 = vcvt.s32.f32 %v308
    %v565 = vcvt.s32.f32 %v309
    %v566 = vcvt.s32.f32 %v310
    %v567 = vcvt.s32.f32 %v311
    %v568 = vcvt.s32.f32 %v312
    %v569 = vcvt.s32.f32 %v313
    %v570 = vcvt.s32.f32 %v314
    %v571 = vcvt.s32.f32 %v315
    %v572 = vcvt.s32.f32 %v316
    %v573 = vcvt.s32.f32 %v317
    %v574 = vcvt.s32.f32 %v318
    %v575 = vcvt.s32.f32 %v319
    %v576 = vcvt.s32.f32 %v320
    %v577 = vcvt.s32.f32 %v321
    %v578 = vcvt.s32.f32 %v322
    %v579 = vcvt.s32.f32 %v323
    %v580 = vcvt.s32.f32 %v324
    %v581 = vcvt.s32.f32 %v325
    %v582 = vcvt.s32.f32 %v326
    %v583 = vcvt.s32.f32 %v327
    %v584 = vcvt.s32.f32 %v328
    %v585 = vcvt.s32.f32 %v329
    %v586 = vcvt.s32.f32 %v330
    %v587 = vcvt.s32.f32 %v331
    %v588 = vcvt.s32.f32 %v332
    %v589 = vcvt.s32.f32 %v333
    %v590 = vcvt.s32.f32 %v334
    %v591 = vcvt.s32.f32 %v335
    %v592 = vcvt.s32.f32 %v336
    %v593 = vcvt.s32.f32 %v337
    %v594 = vcvt.s32.f32 %v338
    %v595 = vcvt.s32.f32 %v339
    %v596 = vcvt.s32.f32 %v340
    %v597 = vcvt.s32.f32 %v341
    %v598 = vcvt.s32.f32 %v342
    %v599 = vcvt.s32.f32 %v343
    %v600 = vcvt.s32.f32 %v344
    %v601 = vcvt.s32.f32 %v345
    %v602 = vcvt.s32.f32 %v346
    %v603 = vcvt.s32.f32 %v347
    %v604 = vcvt.s32.f32 %v348
    %v605 = vcvt.s32.f32 %v349
    %v606 = vcvt.s32.f32 %v350
    %v607 = vcvt.s32.f32 %v351
    %v608 = vcvt.s32.f32 %v352
    %v609 = vcvt.s32.f32 %v353
    %v610 = vcvt.s32.f32 %v354
    %v611 = vcvt.s32.f32 %v355
    %v612 = vcvt.s32.f32 %v356
    %v613 = vcvt.s32.f32 %v357
    %v614 = vcvt.s32.f32 %v358
    %v615 = vcvt.s32.f32 %v359
    %v616 = vcvt.s32.f32 %v360
    %v617 = vcvt.s32.f32 %v361
    %v618 = vcvt.s32.f32 %v362
    %v619 = vcvt.s32.f32 %v363
    %v620 = vcvt.s32.f32 %v364
    %v621 = vcvt.s32.f32 %v365
    %v622 = vcvt.s32.f32 %v366
    %v623 = vcvt.s32.f32 %v367
    %v624 = vcvt.s32.f32 %v368
    %v625 = vcvt.s32.f32 %v369
    %v626 = vcvt.s32.f32 %v370
    %v627 = vcvt.s32.f32 %v371
    %v628 = vcvt.s32.f32 %v372
    %v629 = vcvt.s32.f32 %v373
    %v630 = vcvt.s32.f32 %v374
    %v631 = vcvt.s32.f32 %v375
    %v632 = vcvt.s32.f32 %v376
    %v633 = vcvt.s32.f32 %v377
    %v634 = vcvt.s32.f32 %v378
    %v635 = vcvt.s32.f32 %v379
    %v636 = vcvt.s32.f32 %v380
    %v637 = vcvt.s32.f32 %v381
    %v638 = vcvt.s32.f32 %v382
    %v639 = vcvt.s32.f32 %v383
    %v640 = vcvt.s32.f32 %v384
    %v641 = vcvt.s32.f32 %v385
    %v642 = vcvt.s32.f32 %v386
    %v643 = vcvt.s32.f32 %v387
    %v644 = vcvt.s32.f32 %v388
    %v645 = vcvt.s32.f32 %v389
    %v646 = vcvt.s32.f32 %v390
    %v647 = vcvt.s32.f32 %v391
    %v648 = vcvt.s32.f32 %v392
    %v649 = vcvt.s32.f32 %v393
    %v650 = vcvt.s32.f32 %v394
    %v651 = vcvt.s32.f32 %v395
    %v652 = vcvt.s32.f32 %v396
    %v653 = vcvt.s32.f32 %v397
    %v654 = vcvt.s32.f32 %v398
    %v655 = vcvt.s32.f32 %v399
    %v656 = vcvt.s32.f32 %v400
    %v657 = vcvt.s32.f32 %v401
    %v658 = vcvt.s32.f32 %v402
    %v659 = vcvt.s32.f32 %v403
    %v660 = vcvt.s32.f32 %v404
    %v661 = vcvt.s32.f32 %v405
    %v662 = vcvt.s32.f32 %v406
    %v663 = vcvt.s32.f32 %v407
    %v664 = vcvt.s32.f32 %v408
    %v665 = vcvt.s32.f32 %v409
    %v666 = vcvt.s32.f32 %v410
    %v667 = vcvt.s32.f32 %v411
    %v668 = vcvt.s32.f32 %v412
    %v669 = vcvt.s32.f32 %v413
    %v670 = vcvt.s32.f32 %v414
    %v671 = vcvt.s32.f32 %v415
    %v672 = vcvt.s32.f32 %v416
    %v673 = vcvt.s32.f32 %v417
    %v674 = vcvt.s32.f32 %v418
    %v675 = vcvt.s32.f32 %v419
    %v676 = vcvt.s32.f32 %v420
    %v677 = vcvt.s32.f32 %v421
    %v678 = vcvt.s32.f32 %v422
    %v679 = vcvt.s32.f32 %v423
    %v680 = vcvt.s32.f32 %v424
    %v681 = vcvt.s32.f32 %v425
    %v682 = vcvt.s32.f32 %v426
    %v683 = vcvt.s32.f32 %v427
    %v684 = vcvt.s32.f32 %v428
    %v685 = vcvt.s32.f32 %v429
    %v686 = vcvt.s32.f32 %v430
    %v687 = vcvt.s32.f32 %v431
    %v688 = vcvt.s32.f32 %v432
    %v689 = vcvt.s32.f32 %v433
    %v690 = vcvt.s32.f32 %v434
    %v691 = vcvt.s32.f32 %v435
    %v692 = vcvt.s32.f32 %v436
    %v693 = vcvt.s32.f32 %v437
    %v694 = vcvt.s32.f32 %v438
    %v695 = vcvt.s32.f32 %v439
    %v696 = vcvt.s32.f32 %v440
    %v697 = vcvt.s32.f32 %v441
    %v698 = vcvt.s32.f32 %v442
    %v699 = vcvt.s32.f32 %v443
    %v700 = vcvt.s32.f32 %v444
    %v701 = vcvt.s32.f32 %v445
    %v702 = vcvt.s32.f32 %v446
    %v703 = vcvt.s32.f32 %v447
    %v704 = vcvt.s32.f32 %v448
    %v705 = vcvt.s32.f32 %v449
    %v706 = vcvt.s32.f32 %v450
    %v707 = vcvt.s32.f32 %v451
    %v708 = vcvt.s32.f32 %v452
    %v709 = vcvt.s32.f32 %v453
    %v710 = vcvt.s32.f32 %v454
    %v711 = vcvt.s32.f32 %v455
    %v712 = vcvt.s32.f32 %v456
    %v713 = vcvt.s32.f32 %v457
    %v714 = vcvt.s32.f32 %v458
    %v715 = vcvt.s32.f32 %v459
    %v716 = vcvt.s32.f32 %v460
    %v717 = vcvt.s32.f32 %v461
    %v718 = vcvt.s32.f32 %v462
    %v719 = vcvt.s32.f32 %v463
    %v720 = vcvt.s32.f32 %v464
    %v721 = vcvt.s32.f32 %v465
    %v722 = vcvt.s32.f32 %v466
    %v723 = vcvt.s32.f32 %v467
    %v724 = vcvt.s32.f32 %v468
    %v725 = vcvt.s32.f32 %v469
    %v726 = vcvt.s32.f32 %v470
    %v727 = vcvt.s32.f32 %v471
    %v728 = vcvt.s32.f32 %v472
    %v729 = vcvt.s32.f32 %v473
    %v730 = vcvt.s32.f32 %v474
    %v731 = vcvt.s32.f32 %v475
    %v732 = vcvt.s32.f32 %v476
    %v733 = vcvt.s32.f32 %v477
    %v734 = vcvt.s32.f32 %v478
    %v735 = vcvt.s32.f32 %v479
    %v736 = vcvt.s32.f32 %v480
    %v737 = vcvt.s32.f32 %v481
    %v738 = vcvt.s32.f32 %v482
    %v739 = vcvt.s32.f32 %v483
    %v740 = vcvt.s32.f32 %v484
    %v741 = vcvt.s32.f32 %v485
    %v742 = vpack.c.bf16 %v490, %v486
    %v743 = vpack.c.bf16 %v491, %v487
    %v744 = vpack.c.bf16 %v492, %v488
    %v745 = vpack.c.bf16 %v493, %v489
    %v746 = vpack.c.bf16 %v498, %v494
    %v747 = vpack.c.bf16 %v499, %v495
    %v748 = vpack.c.bf16 %v500, %v496
    %v749 = vpack.c.bf16 %v501, %v497
    %v750 = vpack.c.bf16 %v506, %v502
    %v751 = vpack.c.bf16 %v507, %v503
    %v752 = vpack.c.bf16 %v508, %v504
    %v753 = vpack.c.bf16 %v509, %v505
    %v754 = vpack.c.bf16 %v514, %v510
    %v755 = vpack.c.bf16 %v515, %v511
    %v756 = vpack.c.bf16 %v516, %v512
    %v757 = vpack.c.bf16 %v517, %v513
    %v758 = vpack.c.bf16 %v522, %v518
    %v759 = vpack.c.bf16 %v523, %v519
    %v760 = vpack.c.bf16 %v524, %v520
    %v761 = vpack.c.bf16 %v525, %v521
    %v762 = vpack.c.bf16 %v530, %v526
    %v763 = vpack.c.bf16 %v531, %v527
    %v764 = vpack.c.bf16 %v532, %v528
    %v765 = vpack.c.bf16 %v533, %v529
    %v766 = vpack.c.bf16 %v538, %v534
    %v767 = vpack.c.bf16 %v539, %v535
    %v768 = vpack.c.bf16 %v540, %v536
    %v769 = vpack.c.bf16 %v541, %v537
    %v770 = vpack.c.bf16 %v546, %v542
    %v771 = vpack.c.bf16 %v547, %v543
    %v772 = vpack.c.bf16 %v548, %v544
    %v773 = vpack.c.bf16 %v549, %v545
    %v774 = vpack.c.bf16 %v554, %v550
    %v775 = vpack.c.bf16 %v555, %v551
    %v776 = vpack.c.bf16 %v556, %v552
    %v777 = vpack.c.bf16 %v557, %v553
    %v778 = vpack.c.bf16 %v562, %v558
    %v779 = vpack.c.bf16 %v563, %v559
    %v780 = vpack.c.bf16 %v564, %v560
    %v781 = vpack.c.bf16 %v565, %v561
    %v782 = vpack.c.bf16 %v570, %v566
    %v783 = vpack.c.bf16 %v571, %v567
    %v784 = vpack.c.bf16 %v572, %v568
    %v785 = vpack.c.bf16 %v573, %v569
    %v786 = vpack.c.bf16 %v578, %v574
    %v787 = vpack.c.bf16 %v579, %v575
    %v788 = vpack.c.bf16 %v580, %v576
    %v789 = vpack.c.bf16 %v581, %v577
    %v790 = vpack.c.bf16 %v586, %v582
    %v791 = vpack.c.bf16 %v587, %v583
    %v792 = vpack.c.bf16 %v588, %v584
    %v793 = vpack.c.bf16 %v589, %v585
    %v794 = vpack.c.bf16 %v594, %v590
    %v795 = vpack.c.bf16 %v595, %v591
    %v796 = vpack.c.bf16 %v596, %v592
    %v797 = vpack.c.bf16 %v597, %v593
    %v798 = vpack.c.bf16 %v602, %v598
    %v799 = vpack.c.bf16 %v603, %v599
    %v800 = vpack.c.bf16 %v604, %v600
    %v801 = vpack.c.bf16 %v605, %v601
    %v802 = vpack.c.bf16 %v610, %v606
    %v803 = vpack.c.bf16 %v611, %v607
    %v804 = vpack.c.bf16 %v612, %v608
    %v805 = vpack.c.bf16 %v613, %v609
    %v806 = vpack.c.bf16 %v618, %v614
    %v807 = vpack.c.bf16 %v619, %v615
    %v808 = vpack.c.bf16 %v620, %v616
    %v809 = vpack.c.bf16 %v621, %v617
    %v810 = vpack.c.bf16 %v626, %v622
    %v811 = vpack.c.bf16 %v627, %v623
    %v812 = vpack.c.bf16 %v628, %v624
    %v813 = vpack.c.bf16 %v629, %v625
    %v814 = vpack.c.bf16 %v634, %v630
    %v815 = vpack.c.bf16 %v635, %v631
    %v816 = vpack.c.bf16 %v636, %v632
    %v817 = vpack.c.bf16 %v637, %v633
    %v818 = vpack.c.bf16 %v642, %v638
    %v819 = vpack.c.bf16 %v643, %v639
    %v820 = vpack.c.bf16 %v644, %v640
    %v821 = vpack.c.bf16 %v645, %v641
    %v822 = vpack.c.bf16 %v650, %v646
    %v823 = vpack.c.bf16 %v651, %v647
    %v824 = vpack.c.bf16 %v652, %v648
    %v825 = vpack.c.bf16 %v653, %v649
    %v826 = vpack.c.bf16 %v658, %v654
    %v827 = vpack.c.bf16 %v659, %v655
    %v828 = vpack.c.bf16 %v660, %v656
    %v829 = vpack.c.bf16 %v661, %v657
    %v830 = vpack.c.bf16 %v666, %v662
    %v831 = vpack.c.bf16 %v667, %v663
    %v832 = vpack.c.bf16 %v668, %v664
    %v833 = vpack.c.bf16 %v669, %v665
    %v834 = vpack.c.bf16 %v674, %v670
    %v835 = vpack.c.bf16 %v675, %v671
    %v836 = vpack.c.bf16 %v676, %v672
    %v837 = vpack.c.bf16 %v677, %v673
    %v838 = vpack.c.bf16 %v682, %v678
    %v839 = vpack.c.bf16 %v683, %v679
    %v840 = vpack.c.bf16 %v684, %v680
    %v841 = vpack.c.bf16 %v685, %v681
    %v842 = vpack.c.bf16 %v690, %v686
    %v843 = vpack.c.bf16 %v691, %v687
    %v844 = vpack.c.bf16 %v692, %v688
    %v845 = vpack.c.bf16 %v693, %v689
    %v846 = vpack.c.bf16 %v698, %v694
    %v847 = vpack.c.bf16 %v699, %v695
    %v848 = vpack.c.bf16 %v700, %v696
    %v849 = vpack.c.bf16 %v701, %v697
    %v850 = vpack.c.bf16 %v706, %v702
    %v851 = vpack.c.bf16 %v707, %v703
    %v852 = vpack.c.bf16 %v708, %v704
    %v853 = vpack.c.bf16 %v709, %v705
    %v854 = vpack.c.bf16 %v714, %v710
    %v855 = vpack.c.bf16 %v715, %v711
    %v856 = vpack.c.bf16 %v716, %v712
    %v857 = vpack.c.bf16 %v717, %v713
    %v858 = vpack.c.bf16 %v722, %v718
    %v859 = vpack.c.bf16 %v723, %v719
    %v860 = vpack.c.bf16 %v724, %v720
    %v861 = vpack.c.bf16 %v725, %v721
    %v862 = vpack.c.bf16 %v730, %v726
    %v863 = vpack.c.bf16 %v731, %v727
    %v864 = vpack.c.bf16 %v732, %v728
    %v865 = vpack.c.bf16 %v733, %v729
    %v866 = vpack.c.bf16 %v738, %v734
    %v867 = vpack.c.bf16 %v739, %v735
    %v868 = vpack.c.bf16 %v740, %v736
    %v869 = vpack.c.bf16 %v741, %v737
    %v870 = vld [vmem:[#allocation3] sm:$0xf]
    %v871 = vld [vmem:[#allocation3 + $0x4] sm:$0xf]
    %v872 = vld [vmem:[#allocation3 + $0x8] sm:$0xf]
    %v873 = vld [vmem:[#allocation3 + $0xc] sm:$0xf]
    %v874 = vld [vmem:[#allocation3 + $0x10] sm:$0xf]
    %v875 = vld [vmem:[#allocation3 + $0x14] sm:$0xf]
    %v876 = vld [vmem:[#allocation3 + $0x18] sm:$0xf]
    %v877 = vld [vmem:[#allocation3 + $0x1c] sm:$0xf]
    %v878 = vld [vmem:[#allocation3 + $0x20] sm:$0xf]
    %v879 = vld [vmem:[#allocation3 + $0x24] sm:$0xf]
    %v880 = vld [vmem:[#allocation3 + $0x28] sm:$0xf]
    %v881 = vld [vmem:[#allocation3 + $0x2c] sm:$0xf]
    %v882 = vld [vmem:[#allocation3 + $0x30] sm:$0xf]
    %v883 = vld [vmem:[#allocation3 + $0x34] sm:$0xf]
    %v884 = vld [vmem:[#allocation3 + $0x38] sm:$0xf]
    %v885 = vld [vmem:[#allocation3 + $0x3c] sm:$0xf]
    %v886 = vld [vmem:[#allocation3 + $0x40] sm:$0xf]
    %v887 = vld [vmem:[#allocation3 + $0x44] sm:$0xf]
    %v888 = vld [vmem:[#allocation3 + $0x48] sm:$0xf]
    %v889 = vld [vmem:[#allocation3 + $0x4c] sm:$0xf]
    %v890 = vld [vmem:[#allocation3 + $0x50] sm:$0xf]
    %v891 = vld [vmem:[#allocation3 + $0x54] sm:$0xf]
    %v892 = vld [vmem:[#allocation3 + $0x58] sm:$0xf]
    %v893 = vld [vmem:[#allocation3 + $0x5c] sm:$0xf]
    %v894 = vld [vmem:[#allocation3 + $0x60] sm:$0xf]
    %v895 = vld [vmem:[#allocation3 + $0x64] sm:$0xf]
    %v896 = vld [vmem:[#allocation3 + $0x68] sm:$0xf]
    %v897 = vld [vmem:[#allocation3 + $0x6c] sm:$0xf]
    %v898 = vld [vmem:[#allocation3 + $0x70] sm:$0xf]
    %v899 = vld [vmem:[#allocation3 + $0x74] sm:$0xf]
    %v900 = vld [vmem:[#allocation3 + $0x78] sm:$0xf]
    %v901 = vld [vmem:[#allocation3 + $0x7c] sm:$0xf]
    %v902 = vld [vmem:[#allocation3 + $0x80] sm:$0xf]
    %v903 = vld [vmem:[#allocation3 + $0x84] sm:$0xf]
    %v904 = vld [vmem:[#allocation3 + $0x88] sm:$0xf]
    %v905 = vld [vmem:[#allocation3 + $0x8c] sm:$0xf]
    %v906 = vld [vmem:[#allocation3 + $0x90] sm:$0xf]
    %v907 = vld [vmem:[#allocation3 + $0x94] sm:$0xf]
    %v908 = vld [vmem:[#allocation3 + $0x98] sm:$0xf]
    %v909 = vld [vmem:[#allocation3 + $0x9c] sm:$0xf]
    %v910 = vld [vmem:[#allocation3 + $0xa0] sm:$0xf]
    %v911 = vld [vmem:[#allocation3 + $0xa4] sm:$0xf]
    %v912 = vld [vmem:[#allocation3 + $0xa8] sm:$0xf]
    %v913 = vld [vmem:[#allocation3 + $0xac] sm:$0xf]
    %v914 = vld [vmem:[#allocation3 + $0xb0] sm:$0xf]
    %v915 = vld [vmem:[#allocation3 + $0xb4] sm:$0xf]
    %v916 = vld [vmem:[#allocation3 + $0xb8] sm:$0xf]
    %v917 = vld [vmem:[#allocation3 + $0xbc] sm:$0xf]
    %v918 = vld [vmem:[#allocation3 + $0xc0] sm:$0xf]
    %v919 = vld [vmem:[#allocation3 + $0xc4] sm:$0xf]
    %v920 = vld [vmem:[#allocation3 + $0xc8] sm:$0xf]
    %v921 = vld [vmem:[#allocation3 + $0xcc] sm:$0xf]
    %v922 = vld [vmem:[#allocation3 + $0xd0] sm:$0xf]
    %v923 = vld [vmem:[#allocation3 + $0xd4] sm:$0xf]
    %v924 = vld [vmem:[#allocation3 + $0xd8] sm:$0xf]
    %v925 = vld [vmem:[#allocation3 + $0xdc] sm:$0xf]
    %v926 = vld [vmem:[#allocation3 + $0xe0] sm:$0xf]
    %v927 = vld [vmem:[#allocation3 + $0xe4] sm:$0xf]
    %v928 = vld [vmem:[#allocation3 + $0xe8] sm:$0xf]
    %v929 = vld [vmem:[#allocation3 + $0xec] sm:$0xf]
    %v930 = vld [vmem:[#allocation3 + $0xf0] sm:$0xf]
    %v931 = vld [vmem:[#allocation3 + $0xf4] sm:$0xf]
    %v932 = vld [vmem:[#allocation3 + $0xf8] sm:$0xf]
    %v933 = vld [vmem:[#allocation3 + $0xfc] sm:$0xf]
    %v998 = vunpack.c.l.b16 %v870
    %v999 = vunpack.c.l.b16 %v871
    %v1000 = vunpack.c.l.b16 %v872
    %v1001 = vunpack.c.l.b16 %v873
    %v1002 = vunpack.c.l.b16 %v874
    %v1003 = vunpack.c.l.b16 %v875
    %v1004 = vunpack.c.l.b16 %v876
    %v1005 = vunpack.c.l.b16 %v877
    %v1006 = vunpack.c.l.b16 %v878
    %v1007 = vunpack.c.l.b16 %v879
    %v1008 = vunpack.c.l.b16 %v880
    %v1009 = vunpack.c.l.b16 %v881
    %v1010 = vunpack.c.l.b16 %v882
    %v1011 = vunpack.c.l.b16 %v883
    %v1012 = vunpack.c.l.b16 %v884
    %v1013 = vunpack.c.l.b16 %v885
    %v1014 = vunpack.c.l.b16 %v886
    %v1015 = vunpack.c.l.b16 %v887
    %v1016 = vunpack.c.l.b16 %v888
    %v1017 = vunpack.c.l.b16 %v889
    %v1018 = vunpack.c.l.b16 %v890
    %v1019 = vunpack.c.l.b16 %v891
    %v1020 = vunpack.c.l.b16 %v892
    %v1021 = vunpack.c.l.b16 %v893
    %v1022 = vunpack.c.l.b16 %v894
    %v1023 = vunpack.c.l.b16 %v895
    %v1024 = vunpack.c.l.b16 %v896
    %v1025 = vunpack.c.l.b16 %v897
    %v1026 = vunpack.c.l.b16 %v898
    %v1027 = vunpack.c.l.b16 %v899
    %v1028 = vunpack.c.l.b16 %v900
    %v1029 = vunpack.c.l.b16 %v901
    %v1030 = vunpack.c.l.b16 %v902
    %v1031 = vunpack.c.l.b16 %v903
    %v1032 = vunpack.c.l.b16 %v904
    %v1033 = vunpack.c.l.b16 %v905
    %v1034 = vunpack.c.l.b16 %v906
    %v1035 = vunpack.c.l.b16 %v907
    %v1036 = vunpack.c.l.b16 %v908
    %v1037 = vunpack.c.l.b16 %v909
    %v1038 = vunpack.c.l.b16 %v910
    %v1039 = vunpack.c.l.b16 %v911
    %v1040 = vunpack.c.l.b16 %v912
    %v1041 = vunpack.c.l.b16 %v913
    %v1042 = vunpack.c.l.b16 %v914
    %v1043 = vunpack.c.l.b16 %v915
    %v1044 = vunpack.c.l.b16 %v916
    %v1045 = vunpack.c.l.b16 %v917
    %v1046 = vunpack.c.l.b16 %v918
    %v1047 = vunpack.c.l.b16 %v919
    %v1048 = vunpack.c.l.b16 %v920
    %v1049 = vunpack.c.l.b16 %v921
    %v1050 = vunpack.c.l.b16 %v922
    %v1051 = vunpack.c.l.b16 %v923
    %v1052 = vunpack.c.l.b16 %v924
    %v1053 = vunpack.c.l.b16 %v925
    %v1054 = vunpack.c.l.b16 %v926
    %v1055 = vunpack.c.l.b16 %v927
    %v1056 = vunpack.c.l.b16 %v928
    %v1057 = vunpack.c.l.b16 %v929
    %v1058 = vunpack.c.l.b16 %v930
    %v1059 = vunpack.c.l.b16 %v931
    %v1060 = vunpack.c.l.b16 %v932
    %v1061 = vunpack.c.l.b16 %v933
    %v1062 = vpack.c.b16 %v999, %v998
    %v1063 = vpack.c.b16 %v1001, %v1000
    %v1064 = vpack.c.b16 %v1003, %v1002
    %v1065 = vpack.c.b16 %v1005, %v1004
    %v1066 = vpack.c.b16 %v1007, %v1006
    %v1067 = vpack.c.b16 %v1009, %v1008
    %v1068 = vpack.c.b16 %v1011, %v1010
    %v1069 = vpack.c.b16 %v1013, %v1012
    %v1070 = vpack.c.b16 %v1015, %v1014
    %v1071 = vpack.c.b16 %v1017, %v1016
    %v1072 = vpack.c.b16 %v1019, %v1018
    %v1073 = vpack.c.b16 %v1021, %v1020
    %v1074 = vpack.c.b16 %v1023, %v1022
    %v1075 = vpack.c.b16 %v1025, %v1024
    %v1076 = vpack.c.b16 %v1027, %v1026
    %v1077 = vpack.c.b16 %v1029, %v1028
    %v1078 = vpack.c.b16 %v1031, %v1030
    %v1079 = vpack.c.b16 %v1033, %v1032
    %v1080 = vpack.c.b16 %v1035, %v1034
    %v1081 = vpack.c.b16 %v1037, %v1036
    %v1082 = vpack.c.b16 %v1039, %v1038
    %v1083 = vpack.c.b16 %v1041, %v1040
    %v1084 = vpack.c.b16 %v1043, %v1042
    %v1085 = vpack.c.b16 %v1045, %v1044
    %v1086 = vpack.c.b16 %v1047, %v1046
    %v1087 = vpack.c.b16 %v1049, %v1048
    %v1088 = vpack.c.b16 %v1051, %v1050
    %v1089 = vpack.c.b16 %v1053, %v1052
    %v1090 = vpack.c.b16 %v1055, %v1054
    %v1091 = vpack.c.b16 %v1057, %v1056
    %v1092 = vpack.c.b16 %v1059, %v1058
    %v1093 = vpack.c.b16 %v1061, %v1060
    %1126 = vmatpush.bf16.msra.mxu0 %v1069
    %1127 = vmatpush.bf16.msra.mxu0 %v1068
    %1128 = vmatpush.bf16.msra.mxu0 %v1067
    %1129 = vmatpush.bf16.msra.mxu0 %v1066
    %1130 = vmatpush.bf16.msra.mxu0 %v1065
    %1131 = vmatpush.bf16.msra.mxu0 %v1064
    %1132 = vmatpush.bf16.msra.mxu0 %v1063
    %1133 = vmatpush.bf16.msra.mxu0 %v1062
    %1134 = vmatmul.bf16.gmra.mxu0 %v742
    %v1135 = vpop.f32.mrf.mxu0
    %v1136 = vadd.f32 0.0, %v1135
    %v1137 = vpop.f32.mrf.mxu0
    %v1138 = vadd.f32 0.0, %v1137
    %1139 = vmatmul.bf16.gmra.mxu0 %v746
    %v1140 = vpop.f32.mrf.mxu0
    %v1141 = vadd.f32 0.0, %v1140
    %v1142 = vpop.f32.mrf.mxu0
    %v1143 = vadd.f32 0.0, %v1142
    %1144 = vmatmul.bf16.gmra.mxu0 %v750
    %v1145 = vpop.f32.mrf.mxu0
    %v1146 = vadd.f32 0.0, %v1145
    %v1147 = vpop.f32.mrf.mxu0
    %v1148 = vadd.f32 0.0, %v1147
    %1149 = vmatmul.bf16.gmra.mxu0 %v754
    %v1150 = vpop.f32.mrf.mxu0
    %v1151 = vadd.f32 0.0, %v1150
    %v1152 = vpop.f32.mrf.mxu0
    %v1153 = vadd.f32 0.0, %v1152
    %1154 = vmatmul.bf16.gmra.mxu0 %v758
    %v1155 = vpop.f32.mrf.mxu0
    %v1156 = vadd.f32 0.0, %v1155
    %v1157 = vpop.f32.mrf.mxu0
    %v1158 = vadd.f32 0.0, %v1157
    %1159 = vmatmul.bf16.gmra.mxu0 %v762
    %v1160 = vpop.f32.mrf.mxu0
    %v1161 = vadd.f32 0.0, %v1160
    %v1162 = vpop.f32.mrf.mxu0
    %v1163 = vadd.f32 0.0, %v1162
    %1164 = vmatmul.bf16.gmra.mxu0 %v766
    %v1165 = vpop.f32.mrf.mxu0
    %v1166 = vadd.f32 0.0, %v1165
    %v1167 = vpop.f32.mrf.mxu0
    %v1168 = vadd.f32 0.0, %v1167
    %1169 = vmatmul.bf16.gmra.mxu0 %v770
    %v1170 = vpop.f32.mrf.mxu0
    %v1171 = vadd.f32 0.0, %v1170
    %v1172 = vpop.f32.mrf.mxu0
    %v1173 = vadd.f32 0.0, %v1172
    %1174 = vmatmul.bf16.gmra.mxu0 %v774
    %v1175 = vpop.f32.mrf.mxu0
    %v1176 = vadd.f32 0.0, %v1175
    %v1177 = vpop.f32.mrf.mxu0
    %v1178 = vadd.f32 0.0, %v1177
    %1179 = vmatmul.bf16.gmra.mxu0 %v778
    %v1180 = vpop.f32.mrf.mxu0
    %v1181 = vadd.f32 0.0, %v1180
    %v1182 = vpop.f32.mrf.mxu0
    %v1183 = vadd.f32 0.0, %v1182
    %1184 = vmatmul.bf16.gmra.mxu0 %v782
    %v1185 = vpop.f32.mrf.mxu0
    %v1186 = vadd.f32 0.0, %v1185
    %v1187 = vpop.f32.mrf.mxu0
    %v1188 = vadd.f32 0.0, %v1187
    %1189 = vmatmul.bf16.gmra.mxu0 %v786
    %v1190 = vpop.f32.mrf.mxu0
    %v1191 = vadd.f32 0.0, %v1190
    %v1192 = vpop.f32.mrf.mxu0
    %v1193 = vadd.f32 0.0, %v1192
    %1194 = vmatmul.bf16.gmra.mxu0 %v790
    %v1195 = vpop.f32.mrf.mxu0
    %v1196 = vadd.f32 0.0, %v1195
    %v1197 = vpop.f32.mrf.mxu0
    %v1198 = vadd.f32 0.0, %v1197
    %1199 = vmatmul.bf16.gmra.mxu0 %v794
    %v1200 = vpop.f32.mrf.mxu0
    %v1201 = vadd.f32 0.0, %v1200
    %v1202 = vpop.f32.mrf.mxu0
    %v1203 = vadd.f32 0.0, %v1202
    %1204 = vmatmul.bf16.gmra.mxu0 %v798
    %v1205 = vpop.f32.mrf.mxu0
    %v1206 = vadd.f32 0.0, %v1205
    %v1207 = vpop.f32.mrf.mxu0
    %v1208 = vadd.f32 0.0, %v1207
    %1209 = vmatmul.bf16.gmra.mxu0 %v802
    %v1210 = vpop.f32.mrf.mxu0
    %v1211 = vadd.f32 0.0, %v1210
    %v1212 = vpop.f32.mrf.mxu0
    %v1213 = vadd.f32 0.0, %v1212
    %1214 = vmatmul.bf16.gmra.mxu0 %v806
    %v1215 = vpop.f32.mrf.mxu0
    %v1216 = vadd.f32 0.0, %v1215
    %v1217 = vpop.f32.mrf.mxu0
    %v1218 = vadd.f32 0.0, %v1217
    %1219 = vmatmul.bf16.gmra.mxu0 %v810
    %v1220 = vpop.f32.mrf.mxu0
    %v1221 = vadd.f32 0.0, %v1220
    %v1222 = vpop.f32.mrf.mxu0
    %v1223 = vadd.f32 0.0, %v1222
    %1224 = vmatmul.bf16.gmra.mxu0 %v814
    %v1225 = vpop.f32.mrf.mxu0
    %v1226 = vadd.f32 0.0, %v1225
    %v1227 = vpop.f32.mrf.mxu0
    %v1228 = vadd.f32 0.0, %v1227
    %1229 = vmatmul.bf16.gmra.mxu0 %v818
    %v1230 = vpop.f32.mrf.mxu0
    %v1231 = vadd.f32 0.0, %v1230
    %v1232 = vpop.f32.mrf.mxu0
    %v1233 = vadd.f32 0.0, %v1232
    %1234 = vmatmul.bf16.gmra.mxu0 %v822
    %v1235 = vpop.f32.mrf.mxu0
    %v1236 = vadd.f32 0.0, %v1235
    %v1237 = vpop.f32.mrf.mxu0
    %v1238 = vadd.f32 0.0, %v1237
    %1239 = vmatmul.bf16.gmra.mxu0 %v826
    %v1240 = vpop.f32.mrf.mxu0
    %v1241 = vadd.f32 0.0, %v1240
    %v1242 = vpop.f32.mrf.mxu0
    %v1243 = vadd.f32 0.0, %v1242
    %1244 = vmatmul.bf16.gmra.mxu0 %v830
    %v1245 = vpop.f32.mrf.mxu0
    %v1246 = vadd.f32 0.0, %v1245
    %v1247 = vpop.f32.mrf.mxu0
    %v1248 = vadd.f32 0.0, %v1247
    %1249 = vmatmul.bf16.gmra.mxu0 %v834
    %v1250 = vpop.f32.mrf.mxu0
    %v1251 = vadd.f32 0.0, %v1250
    %v1252 = vpop.f32.mrf.mxu0
    %v1253 = vadd.f32 0.0, %v1252
    %1254 = vmatmul.bf16.gmra.mxu0 %v838
    %v1255 = vpop.f32.mrf.mxu0
    %v1256 = vadd.f32 0.0, %v1255
    %v1257 = vpop.f32.mrf.mxu0
    %v1258 = vadd.f32 0.0, %v1257
    %1259 = vmatmul.bf16.gmra.mxu0 %v842
    %v1260 = vpop.f32.mrf.mxu0
    %v1261 = vadd.f32 0.0, %v1260
    %v1262 = vpop.f32.mrf.mxu0
    %v1263 = vadd.f32 0.0, %v1262
    %1264 = vmatmul.bf16.gmra.mxu0 %v846
    %v1265 = vpop.f32.mrf.mxu0
    %v1266 = vadd.f32 0.0, %v1265
    %v1267 = vpop.f32.mrf.mxu0
    %v1268 = vadd.f32 0.0, %v1267
    %1269 = vmatmul.bf16.gmra.mxu0 %v850
    %v1270 = vpop.f32.mrf.mxu0
    %v1271 = vadd.f32 0.0, %v1270
    %v1272 = vpop.f32.mrf.mxu0
    %v1273 = vadd.f32 0.0, %v1272
    %1274 = vmatmul.bf16.gmra.mxu0 %v854
    %v1275 = vpop.f32.mrf.mxu0
    %v1276 = vadd.f32 0.0, %v1275
    %v1277 = vpop.f32.mrf.mxu0
    %v1278 = vadd.f32 0.0, %v1277
    %1279 = vmatmul.bf16.gmra.mxu0 %v858
    %v1280 = vpop.f32.mrf.mxu0
    %v1281 = vadd.f32 0.0, %v1280
    %v1282 = vpop.f32.mrf.mxu0
    %v1283 = vadd.f32 0.0, %v1282
    %1284 = vmatmul.bf16.gmra.mxu0 %v862
    %v1285 = vpop.f32.mrf.mxu0
    %v1286 = vadd.f32 0.0, %v1285
    %v1287 = vpop.f32.mrf.mxu0
    %v1288 = vadd.f32 0.0, %v1287
    %1289 = vmatmul.bf16.gmra.mxu0 %v866
    %v1290 = vpop.f32.mrf.mxu0
    %v1291 = vadd.f32 0.0, %v1290
    %v1292 = vpop.f32.mrf.mxu0
    %v1293 = vadd.f32 0.0, %v1292
    %1294 = vdwg.mxu0
    %1295 = vmatpush.bf16.msra.mxu0 %v1077
    %1296 = vmatpush.bf16.msra.mxu0 %v1076
    %1297 = vmatpush.bf16.msra.mxu0 %v1075
    %1298 = vmatpush.bf16.msra.mxu0 %v1074
    %1299 = vmatpush.bf16.msra.mxu0 %v1073
    %1300 = vmatpush.bf16.msra.mxu0 %v1072
    %1301 = vmatpush.bf16.msra.mxu0 %v1071
    %1302 = vmatpush.bf16.msra.mxu0 %v1070
    %1303 = vmatmul.bf16.gmra.mxu0 %v743
    %v1304 = vpop.f32.mrf.mxu0
    %v1305 = vadd.f32 %v1136, %v1304
    %v1306 = vpop.f32.mrf.mxu0
    %v1307 = vadd.f32 %v1138, %v1306
    %1308 = vmatmul.bf16.gmra.mxu0 %v747
    %v1309 = vpop.f32.mrf.mxu0
    %v1310 = vadd.f32 %v1141, %v1309
    %v1311 = vpop.f32.mrf.mxu0
    %v1312 = vadd.f32 %v1143, %v1311
    %1313 = vmatmul.bf16.gmra.mxu0 %v751
    %v1314 = vpop.f32.mrf.mxu0
    %v1315 = vadd.f32 %v1146, %v1314
    %v1316 = vpop.f32.mrf.mxu0
    %v1317 = vadd.f32 %v1148, %v1316
    %1318 = vmatmul.bf16.gmra.mxu0 %v755
    %v1319 = vpop.f32.mrf.mxu0
    %v1320 = vadd.f32 %v1151, %v1319
    %v1321 = vpop.f32.mrf.mxu0
    %v1322 = vadd.f32 %v1153, %v1321
    %1323 = vmatmul.bf16.gmra.mxu0 %v759
    %v1324 = vpop.f32.mrf.mxu0
    %v1325 = vadd.f32 %v1156, %v1324
    %v1326 = vpop.f32.mrf.mxu0
    %v1327 = vadd.f32 %v1158, %v1326
    %1328 = vmatmul.bf16.gmra.mxu0 %v763
    %v1329 = vpop.f32.mrf.mxu0
    %v1330 = vadd.f32 %v1161, %v1329
    %v1331 = vpop.f32.mrf.mxu0
    %v1332 = vadd.f32 %v1163, %v1331
    %1333 = vmatmul.bf16.gmra.mxu0 %v767
    %v1334 = vpop.f32.mrf.mxu0
    %v1335 = vadd.f32 %v1166, %v1334
    %v1336 = vpop.f32.mrf.mxu0
    %v1337 = vadd.f32 %v1168, %v1336
    %1338 = vmatmul.bf16.gmra.mxu0 %v771
    %v1339 = vpop.f32.mrf.mxu0
    %v1340 = vadd.f32 %v1171, %v1339
    %v1341 = vpop.f32.mrf.mxu0
    %v1342 = vadd.f32 %v1173, %v1341
    %1343 = vmatmul.bf16.gmra.mxu0 %v775
    %v1344 = vpop.f32.mrf.mxu0
    %v1345 = vadd.f32 %v1176, %v1344
    %v1346 = vpop.f32.mrf.mxu0
    %v1347 = vadd.f32 %v1178, %v1346
    %1348 = vmatmul.bf16.gmra.mxu0 %v779
    %v1349 = vpop.f32.mrf.mxu0
    %v1350 = vadd.f32 %v1181, %v1349
    %v1351 = vpop.f32.mrf.mxu0
    %v1352 = vadd.f32 %v1183, %v1351
    %1353 = vmatmul.bf16.gmra.mxu0 %v783
    %v1354 = vpop.f32.mrf.mxu0
    %v1355 = vadd.f32 %v1186, %v1354
    %v1356 = vpop.f32.mrf.mxu0
    %v1357 = vadd.f32 %v1188, %v1356
    %1358 = vmatmul.bf16.gmra.mxu0 %v787
    %v1359 = vpop.f32.mrf.mxu0
    %v1360 = vadd.f32 %v1191, %v1359
    %v1361 = vpop.f32.mrf.mxu0
    %v1362 = vadd.f32 %v1193, %v1361
    %1363 = vmatmul.bf16.gmra.mxu0 %v791
    %v1364 = vpop.f32.mrf.mxu0
    %v1365 = vadd.f32 %v1196, %v1364
    %v1366 = vpop.f32.mrf.mxu0
    %v1367 = vadd.f32 %v1198, %v1366
    %1368 = vmatmul.bf16.gmra.mxu0 %v795
    %v1369 = vpop.f32.mrf.mxu0
    %v1370 = vadd.f32 %v1201, %v1369
    %v1371 = vpop.f32.mrf.mxu0
    %v1372 = vadd.f32 %v1203, %v1371
    %1373 = vmatmul.bf16.gmra.mxu0 %v799
    %v1374 = vpop.f32.mrf.mxu0
    %v1375 = vadd.f32 %v1206, %v1374
    %v1376 = vpop.f32.mrf.mxu0
    %v1377 = vadd.f32 %v1208, %v1376
    %1378 = vmatmul.bf16.gmra.mxu0 %v803
    %v1379 = vpop.f32.mrf.mxu0
    %v1380 = vadd.f32 %v1211, %v1379
    %v1381 = vpop.f32.mrf.mxu0
    %v1382 = vadd.f32 %v1213, %v1381
    %1383 = vmatmul.bf16.gmra.mxu0 %v807
    %v1384 = vpop.f32.mrf.mxu0
    %v1385 = vadd.f32 %v1216, %v1384
    %v1386 = vpop.f32.mrf.mxu0
    %v1387 = vadd.f32 %v1218, %v1386
    %1388 = vmatmul.bf16.gmra.mxu0 %v811
    %v1389 = vpop.f32.mrf.mxu0
    %v1390 = vadd.f32 %v1221, %v1389
    %v1391 = vpop.f32.mrf.mxu0
    %v1392 = vadd.f32 %v1223, %v1391
    %1393 = vmatmul.bf16.gmra.mxu0 %v815
    %v1394 = vpop.f32.mrf.mxu0
    %v1395 = vadd.f32 %v1226, %v1394
    %v1396 = vpop.f32.mrf.mxu0
    %v1397 = vadd.f32 %v1228, %v1396
    %1398 = vmatmul.bf16.gmra.mxu0 %v819
    %v1399 = vpop.f32.mrf.mxu0
    %v1400 = vadd.f32 %v1231, %v1399
    %v1401 = vpop.f32.mrf.mxu0
    %v1402 = vadd.f32 %v1233, %v1401
    %1403 = vmatmul.bf16.gmra.mxu0 %v823
    %v1404 = vpop.f32.mrf.mxu0
    %v1405 = vadd.f32 %v1236, %v1404
    %v1406 = vpop.f32.mrf.mxu0
    %v1407 = vadd.f32 %v1238, %v1406
    %1408 = vmatmul.bf16.gmra.mxu0 %v827
    %v1409 = vpop.f32.mrf.mxu0
    %v1410 = vadd.f32 %v1241, %v1409
    %v1411 = vpop.f32.mrf.mxu0
    %v1412 = vadd.f32 %v1243, %v1411
    %1413 = vmatmul.bf16.gmra.mxu0 %v831
    %v1414 = vpop.f32.mrf.mxu0
    %v1415 = vadd.f32 %v1246, %v1414
    %v1416 = vpop.f32.mrf.mxu0
    %v1417 = vadd.f32 %v1248, %v1416
    %1418 = vmatmul.bf16.gmra.mxu0 %v835
    %v1419 = vpop.f32.mrf.mxu0
    %v1420 = vadd.f32 %v1251, %v1419
    %v1421 = vpop.f32.mrf.mxu0
    %v1422 = vadd.f32 %v1253, %v1421
    %1423 = vmatmul.bf16.gmra.mxu0 %v839
    %v1424 = vpop.f32.mrf.mxu0
    %v1425 = vadd.f32 %v1256, %v1424
    %v1426 = vpop.f32.mrf.mxu0
    %v1427 = vadd.f32 %v1258, %v1426
    %1428 = vmatmul.bf16.gmra.mxu0 %v843
    %v1429 = vpop.f32.mrf.mxu0
    %v1430 = vadd.f32 %v1261, %v1429
    %v1431 = vpop.f32.mrf.mxu0
    %v1432 = vadd.f32 %v1263, %v1431
    %1433 = vmatmul.bf16.gmra.mxu0 %v847
    %v1434 = vpop.f32.mrf.mxu0
    %v1435 = vadd.f32 %v1266, %v1434
    %v1436 = vpop.f32.mrf.mxu0
    %v1437 = vadd.f32 %v1268, %v1436
    %1438 = vmatmul.bf16.gmra.mxu0 %v851
    %v1439 = vpop.f32.mrf.mxu0
    %v1440 = vadd.f32 %v1271, %v1439
    %v1441 = vpop.f32.mrf.mxu0
    %v1442 = vadd.f32 %v1273, %v1441
    %1443 = vmatmul.bf16.gmra.mxu0 %v855
    %v1444 = vpop.f32.mrf.mxu0
    %v1445 = vadd.f32 %v1276, %v1444
    %v1446 = vpop.f32.mrf.mxu0
    %v1447 = vadd.f32 %v1278, %v1446
    %1448 = vmatmul.bf16.gmra.mxu0 %v859
    %v1449 = vpop.f32.mrf.mxu0
    %v1450 = vadd.f32 %v1281, %v1449
    %v1451 = vpop.f32.mrf.mxu0
    %v1452 = vadd.f32 %v1283, %v1451
    %1453 = vmatmul.bf16.gmra.mxu0 %v863
    %v1454 = vpop.f32.mrf.mxu0
    %v1455 = vadd.f32 %v1286, %v1454
    %v1456 = vpop.f32.mrf.mxu0
    %v1457 = vadd.f32 %v1288, %v1456
    %1458 = vmatmul.bf16.gmra.mxu0 %v867
    %v1459 = vpop.f32.mrf.mxu0
    %v1460 = vadd.f32 %v1291, %v1459
    %v1461 = vpop.f32.mrf.mxu0
    %v1462 = vadd.f32 %v1293, %v1461
    %1463 = vdwg.mxu0
    %1464 = vmatpush.bf16.msra.mxu0 %v1085
    %1465 = vmatpush.bf16.msra.mxu0 %v1084
    %1466 = vmatpush.bf16.msra.mxu0 %v1083
    %1467 = vmatpush.bf16.msra.mxu0 %v1082
    %1468 = vmatpush.bf16.msra.mxu0 %v1081
    %1469 = vmatpush.bf16.msra.mxu0 %v1080
    %1470 = vmatpush.bf16.msra.mxu0 %v1079
    %1471 = vmatpush.bf16.msra.mxu0 %v1078
    %1472 = vmatmul.bf16.gmra.mxu0 %v744
    %v1473 = vpop.f32.mrf.mxu0
    %v1474 = vadd.f32 %v1305, %v1473
    %v1475 = vpop.f32.mrf.mxu0
    %v1476 = vadd.f32 %v1307, %v1475
    %1477 = vmatmul.bf16.gmra.mxu0 %v748
    %v1478 = vpop.f32.mrf.mxu0
    %v1479 = vadd.f32 %v1310, %v1478
    %v1480 = vpop.f32.mrf.mxu0
    %v1481 = vadd.f32 %v1312, %v1480
    %1482 = vmatmul.bf16.gmra.mxu0 %v752
    %v1483 = vpop.f32.mrf.mxu0
    %v1484 = vadd.f32 %v1315, %v1483
    %v1485 = vpop.f32.mrf.mxu0
    %v1486 = vadd.f32 %v1317, %v1485
    %1487 = vmatmul.bf16.gmra.mxu0 %v756
    %v1488 = vpop.f32.mrf.mxu0
    %v1489 = vadd.f32 %v1320, %v1488
    %v1490 = vpop.f32.mrf.mxu0
    %v1491 = vadd.f32 %v1322, %v1490
    %1492 = vmatmul.bf16.gmra.mxu0 %v760
    %v1493 = vpop.f32.mrf.mxu0
    %v1494 = vadd.f32 %v1325, %v1493
    %v1495 = vpop.f32.mrf.mxu0
    %v1496 = vadd.f32 %v1327, %v1495
    %1497 = vmatmul.bf16.gmra.mxu0 %v764
    %v1498 = vpop.f32.mrf.mxu0
    %v1499 = vadd.f32 %v1330, %v1498
    %v1500 = vpop.f32.mrf.mxu0
    %v1501 = vadd.f32 %v1332, %v1500
    %1502 = vmatmul.bf16.gmra.mxu0 %v768
    %v1503 = vpop.f32.mrf.mxu0
    %v1504 = vadd.f32 %v1335, %v1503
    %v1505 = vpop.f32.mrf.mxu0
    %v1506 = vadd.f32 %v1337, %v1505
    %1507 = vmatmul.bf16.gmra.mxu0 %v772
    %v1508 = vpop.f32.mrf.mxu0
    %v1509 = vadd.f32 %v1340, %v1508
    %v1510 = vpop.f32.mrf.mxu0
    %v1511 = vadd.f32 %v1342, %v1510
    %1512 = vmatmul.bf16.gmra.mxu0 %v776
    %v1513 = vpop.f32.mrf.mxu0
    %v1514 = vadd.f32 %v1345, %v1513
    %v1515 = vpop.f32.mrf.mxu0
    %v1516 = vadd.f32 %v1347, %v1515
    %1517 = vmatmul.bf16.gmra.mxu0 %v780
    %v1518 = vpop.f32.mrf.mxu0
    %v1519 = vadd.f32 %v1350, %v1518
    %v1520 = vpop.f32.mrf.mxu0
    %v1521 = vadd.f32 %v1352, %v1520
    %1522 = vmatmul.bf16.gmra.mxu0 %v784
    %v1523 = vpop.f32.mrf.mxu0
    %v1524 = vadd.f32 %v1355, %v1523
    %v1525 = vpop.f32.mrf.mxu0
    %v1526 = vadd.f32 %v1357, %v1525
    %1527 = vmatmul.bf16.gmra.mxu0 %v788
    %v1528 = vpop.f32.mrf.mxu0
    %v1529 = vadd.f32 %v1360, %v1528
    %v1530 = vpop.f32.mrf.mxu0
    %v1531 = vadd.f32 %v1362, %v1530
    %1532 = vmatmul.bf16.gmra.mxu0 %v792
    %v1533 = vpop.f32.mrf.mxu0
    %v1534 = vadd.f32 %v1365, %v1533
    %v1535 = vpop.f32.mrf.mxu0
    %v1536 = vadd.f32 %v1367, %v1535
    %1537 = vmatmul.bf16.gmra.mxu0 %v796
    %v1538 = vpop.f32.mrf.mxu0
    %v1539 = vadd.f32 %v1370, %v1538
    %v1540 = vpop.f32.mrf.mxu0
    %v1541 = vadd.f32 %v1372, %v1540
    %1542 = vmatmul.bf16.gmra.mxu0 %v800
    %v1543 = vpop.f32.mrf.mxu0
    %v1544 = vadd.f32 %v1375, %v1543
    %v1545 = vpop.f32.mrf.mxu0
    %v1546 = vadd.f32 %v1377, %v1545
    %1547 = vmatmul.bf16.gmra.mxu0 %v804
    %v1548 = vpop.f32.mrf.mxu0
    %v1549 = vadd.f32 %v1380, %v1548
    %v1550 = vpop.f32.mrf.mxu0
    %v1551 = vadd.f32 %v1382, %v1550
    %1552 = vmatmul.bf16.gmra.mxu0 %v808
    %v1553 = vpop.f32.mrf.mxu0
    %v1554 = vadd.f32 %v1385, %v1553
    %v1555 = vpop.f32.mrf.mxu0
    %v1556 = vadd.f32 %v1387, %v1555
    %1557 = vmatmul.bf16.gmra.mxu0 %v812
    %v1558 = vpop.f32.mrf.mxu0
    %v1559 = vadd.f32 %v1390, %v1558
    %v1560 = vpop.f32.mrf.mxu0
    %v1561 = vadd.f32 %v1392, %v1560
    %1562 = vmatmul.bf16.gmra.mxu0 %v816
    %v1563 = vpop.f32.mrf.mxu0
    %v1564 = vadd.f32 %v1395, %v1563
    %v1565 = vpop.f32.mrf.mxu0
    %v1566 = vadd.f32 %v1397, %v1565
    %1567 = vmatmul.bf16.gmra.mxu0 %v820
    %v1568 = vpop.f32.mrf.mxu0
    %v1569 = vadd.f32 %v1400, %v1568
    %v1570 = vpop.f32.mrf.mxu0
    %v1571 = vadd.f32 %v1402, %v1570
    %1572 = vmatmul.bf16.gmra.mxu0 %v824
    %v1573 = vpop.f32.mrf.mxu0
    %v1574 = vadd.f32 %v1405, %v1573
    %v1575 = vpop.f32.mrf.mxu0
    %v1576 = vadd.f32 %v1407, %v1575
    %1577 = vmatmul.bf16.gmra.mxu0 %v828
    %v1578 = vpop.f32.mrf.mxu0
    %v1579 = vadd.f32 %v1410, %v1578
    %v1580 = vpop.f32.mrf.mxu0
    %v1581 = vadd.f32 %v1412, %v1580
    %1582 = vmatmul.bf16.gmra.mxu0 %v832
    %v1583 = vpop.f32.mrf.mxu0
    %v1584 = vadd.f32 %v1415, %v1583
    %v1585 = vpop.f32.mrf.mxu0
    %v1586 = vadd.f32 %v1417, %v1585
    %1587 = vmatmul.bf16.gmra.mxu0 %v836
    %v1588 = vpop.f32.mrf.mxu0
    %v1589 = vadd.f32 %v1420, %v1588
    %v1590 = vpop.f32.mrf.mxu0
    %v1591 = vadd.f32 %v1422, %v1590
    %1592 = vmatmul.bf16.gmra.mxu0 %v840
    %v1593 = vpop.f32.mrf.mxu0
    %v1594 = vadd.f32 %v1425, %v1593
    %v1595 = vpop.f32.mrf.mxu0
    %v1596 = vadd.f32 %v1427, %v1595
    %1597 = vmatmul.bf16.gmra.mxu0 %v844
    %v1598 = vpop.f32.mrf.mxu0
    %v1599 = vadd.f32 %v1430, %v1598
    %v1600 = vpop.f32.mrf.mxu0
    %v1601 = vadd.f32 %v1432, %v1600
    %1602 = vmatmul.bf16.gmra.mxu0 %v848
    %v1603 = vpop.f32.mrf.mxu0
    %v1604 = vadd.f32 %v1435, %v1603
    %v1605 = vpop.f32.mrf.mxu0
    %v1606 = vadd.f32 %v1437, %v1605
    %1607 = vmatmul.bf16.gmra.mxu0 %v852
    %v1608 = vpop.f32.mrf.mxu0
    %v1609 = vadd.f32 %v1440, %v1608
    %v1610 = vpop.f32.mrf.mxu0
    %v1611 = vadd.f32 %v1442, %v1610
    %1612 = vmatmul.bf16.gmra.mxu0 %v856
    %v1613 = vpop.f32.mrf.mxu0
    %v1614 = vadd.f32 %v1445, %v1613
    %v1615 = vpop.f32.mrf.mxu0
    %v1616 = vadd.f32 %v1447, %v1615
    %1617 = vmatmul.bf16.gmra.mxu0 %v860
    %v1618 = vpop.f32.mrf.mxu0
    %v1619 = vadd.f32 %v1450, %v1618
    %v1620 = vpop.f32.mrf.mxu0
    %v1621 = vadd.f32 %v1452, %v1620
    %1622 = vmatmul.bf16.gmra.mxu0 %v864
    %v1623 = vpop.f32.mrf.mxu0
    %v1624 = vadd.f32 %v1455, %v1623
    %v1625 = vpop.f32.mrf.mxu0
    %v1626 = vadd.f32 %v1457, %v1625
    %1627 = vmatmul.bf16.gmra.mxu0 %v868
    %v1628 = vpop.f32.mrf.mxu0
    %v1629 = vadd.f32 %v1460, %v1628
    %v1630 = vpop.f32.mrf.mxu0
    %v1631 = vadd.f32 %v1462, %v1630
    %1632 = vdwg.mxu0
    %1633 = vmatpush.bf16.msra.mxu0 %v1093
    %1634 = vmatpush.bf16.msra.mxu0 %v1092
    %1635 = vmatpush.bf16.msra.mxu0 %v1091
    %1636 = vmatpush.bf16.msra.mxu0 %v1090
    %1637 = vmatpush.bf16.msra.mxu0 %v1089
    %1638 = vmatpush.bf16.msra.mxu0 %v1088
    %1639 = vmatpush.bf16.msra.mxu0 %v1087
    %1640 = vmatpush.bf16.msra.mxu0 %v1086
    %1641 = vmatmul.bf16.gmra.mxu0 %v745
    %v1642 = vpop.f32.mrf.mxu0
    %v1643 = vadd.f32 %v1474, %v1642
    %v1644 = vpop.f32.mrf.mxu0
    %v1645 = vadd.f32 %v1476, %v1644
    %1646 = vmatmul.bf16.gmra.mxu0 %v749
    %v1647 = vpop.f32.mrf.mxu0
    %v1648 = vadd.f32 %v1479, %v1647
    %v1649 = vpop.f32.mrf.mxu0
    %v1650 = vadd.f32 %v1481, %v1649
    %1651 = vmatmul.bf16.gmra.mxu0 %v753
    %v1652 = vpop.f32.mrf.mxu0
    %v1653 = vadd.f32 %v1484, %v1652
    %v1654 = vpop.f32.mrf.mxu0
    %v1655 = vadd.f32 %v1486, %v1654
    %1656 = vmatmul.bf16.gmra.mxu0 %v757
    %v1657 = vpop.f32.mrf.mxu0
    %v1658 = vadd.f32 %v1489, %v1657
    %v1659 = vpop.f32.mrf.mxu0
    %v1660 = vadd.f32 %v1491, %v1659
    %1661 = vmatmul.bf16.gmra.mxu0 %v761
    %v1662 = vpop.f32.mrf.mxu0
    %v1663 = vadd.f32 %v1494, %v1662
    %v1664 = vpop.f32.mrf.mxu0
    %v1665 = vadd.f32 %v1496, %v1664
    %1666 = vmatmul.bf16.gmra.mxu0 %v765
    %v1667 = vpop.f32.mrf.mxu0
    %v1668 = vadd.f32 %v1499, %v1667
    %v1669 = vpop.f32.mrf.mxu0
    %v1670 = vadd.f32 %v1501, %v1669
    %1671 = vmatmul.bf16.gmra.mxu0 %v769
    %v1672 = vpop.f32.mrf.mxu0
    %v1673 = vadd.f32 %v1504, %v1672
    %v1674 = vpop.f32.mrf.mxu0
    %v1675 = vadd.f32 %v1506, %v1674
    %1676 = vmatmul.bf16.gmra.mxu0 %v773
    %v1677 = vpop.f32.mrf.mxu0
    %v1678 = vadd.f32 %v1509, %v1677
    %v1679 = vpop.f32.mrf.mxu0
    %v1680 = vadd.f32 %v1511, %v1679
    %1681 = vmatmul.bf16.gmra.mxu0 %v777
    %v1682 = vpop.f32.mrf.mxu0
    %v1683 = vadd.f32 %v1514, %v1682
    %v1684 = vpop.f32.mrf.mxu0
    %v1685 = vadd.f32 %v1516, %v1684
    %1686 = vmatmul.bf16.gmra.mxu0 %v781
    %v1687 = vpop.f32.mrf.mxu0
    %v1688 = vadd.f32 %v1519, %v1687
    %v1689 = vpop.f32.mrf.mxu0
    %v1690 = vadd.f32 %v1521, %v1689
    %1691 = vmatmul.bf16.gmra.mxu0 %v785
    %v1692 = vpop.f32.mrf.mxu0
    %v1693 = vadd.f32 %v1524, %v1692
    %v1694 = vpop.f32.mrf.mxu0
    %v1695 = vadd.f32 %v1526, %v1694
    %1696 = vmatmul.bf16.gmra.mxu0 %v789
    %v1697 = vpop.f32.mrf.mxu0
    %v1698 = vadd.f32 %v1529, %v1697
    %v1699 = vpop.f32.mrf.mxu0
    %v1700 = vadd.f32 %v1531, %v1699
    %1701 = vmatmul.bf16.gmra.mxu0 %v793
    %v1702 = vpop.f32.mrf.mxu0
    %v1703 = vadd.f32 %v1534, %v1702
    %v1704 = vpop.f32.mrf.mxu0
    %v1705 = vadd.f32 %v1536, %v1704
    %1706 = vmatmul.bf16.gmra.mxu0 %v797
    %v1707 = vpop.f32.mrf.mxu0
    %v1708 = vadd.f32 %v1539, %v1707
    %v1709 = vpop.f32.mrf.mxu0
    %v1710 = vadd.f32 %v1541, %v1709
    %1711 = vmatmul.bf16.gmra.mxu0 %v801
    %v1712 = vpop.f32.mrf.mxu0
    %v1713 = vadd.f32 %v1544, %v1712
    %v1714 = vpop.f32.mrf.mxu0
    %v1715 = vadd.f32 %v1546, %v1714
    %1716 = vmatmul.bf16.gmra.mxu0 %v805
    %v1717 = vpop.f32.mrf.mxu0
    %v1718 = vadd.f32 %v1549, %v1717
    %v1719 = vpop.f32.mrf.mxu0
    %v1720 = vadd.f32 %v1551, %v1719
    %1721 = vmatmul.bf16.gmra.mxu0 %v809
    %v1722 = vpop.f32.mrf.mxu0
    %v1723 = vadd.f32 %v1554, %v1722
    %v1724 = vpop.f32.mrf.mxu0
    %v1725 = vadd.f32 %v1556, %v1724
    %1726 = vmatmul.bf16.gmra.mxu0 %v813
    %v1727 = vpop.f32.mrf.mxu0
    %v1728 = vadd.f32 %v1559, %v1727
    %v1729 = vpop.f32.mrf.mxu0
    %v1730 = vadd.f32 %v1561, %v1729
    %1731 = vmatmul.bf16.gmra.mxu0 %v817
    %v1732 = vpop.f32.mrf.mxu0
    %v1733 = vadd.f32 %v1564, %v1732
    %v1734 = vpop.f32.mrf.mxu0
    %v1735 = vadd.f32 %v1566, %v1734
    %1736 = vmatmul.bf16.gmra.mxu0 %v821
    %v1737 = vpop.f32.mrf.mxu0
    %v1738 = vadd.f32 %v1569, %v1737
    %v1739 = vpop.f32.mrf.mxu0
    %v1740 = vadd.f32 %v1571, %v1739
    %1741 = vmatmul.bf16.gmra.mxu0 %v825
    %v1742 = vpop.f32.mrf.mxu0
    %v1743 = vadd.f32 %v1574, %v1742
    %v1744 = vpop.f32.mrf.mxu0
    %v1745 = vadd.f32 %v1576, %v1744
    %1746 = vmatmul.bf16.gmra.mxu0 %v829
    %v1747 = vpop.f32.mrf.mxu0
    %v1748 = vadd.f32 %v1579, %v1747
    %v1749 = vpop.f32.mrf.mxu0
    %v1750 = vadd.f32 %v1581, %v1749
    %1751 = vmatmul.bf16.gmra.mxu0 %v833
    %v1752 = vpop.f32.mrf.mxu0
    %v1753 = vadd.f32 %v1584, %v1752
    %v1754 = vpop.f32.mrf.mxu0
    %v1755 = vadd.f32 %v1586, %v1754
    %1756 = vmatmul.bf16.gmra.mxu0 %v837
    %v1757 = vpop.f32.mrf.mxu0
    %v1758 = vadd.f32 %v1589, %v1757
    %v1759 = vpop.f32.mrf.mxu0
    %v1760 = vadd.f32 %v1591, %v1759
    %1761 = vmatmul.bf16.gmra.mxu0 %v841
    %v1762 = vpop.f32.mrf.mxu0
    %v1763 = vadd.f32 %v1594, %v1762
    %v1764 = vpop.f32.mrf.mxu0
    %v1765 = vadd.f32 %v1596, %v1764
    %1766 = vmatmul.bf16.gmra.mxu0 %v845
    %v1767 = vpop.f32.mrf.mxu0
    %v1768 = vadd.f32 %v1599, %v1767
    %v1769 = vpop.f32.mrf.mxu0
    %v1770 = vadd.f32 %v1601, %v1769
    %1771 = vmatmul.bf16.gmra.mxu0 %v849
    %v1772 = vpop.f32.mrf.mxu0
    %v1773 = vadd.f32 %v1604, %v1772
    %v1774 = vpop.f32.mrf.mxu0
    %v1775 = vadd.f32 %v1606, %v1774
    %1776 = vmatmul.bf16.gmra.mxu0 %v853
    %v1777 = vpop.f32.mrf.mxu0
    %v1778 = vadd.f32 %v1609, %v1777
    %v1779 = vpop.f32.mrf.mxu0
    %v1780 = vadd.f32 %v1611, %v1779
    %1781 = vmatmul.bf16.gmra.mxu0 %v857
    %v1782 = vpop.f32.mrf.mxu0
    %v1783 = vadd.f32 %v1614, %v1782
    %v1784 = vpop.f32.mrf.mxu0
    %v1785 = vadd.f32 %v1616, %v1784
    %1786 = vmatmul.bf16.gmra.mxu0 %v861
    %v1787 = vpop.f32.mrf.mxu0
    %v1788 = vadd.f32 %v1619, %v1787
    %v1789 = vpop.f32.mrf.mxu0
    %v1790 = vadd.f32 %v1621, %v1789
    %1791 = vmatmul.bf16.gmra.mxu0 %v865
    %v1792 = vpop.f32.mrf.mxu0
    %v1793 = vadd.f32 %v1624, %v1792
    %v1794 = vpop.f32.mrf.mxu0
    %v1795 = vadd.f32 %v1626, %v1794
    %1796 = vmatmul.bf16.gmra.mxu0 %v869
    %v1797 = vpop.f32.mrf.mxu0
    %v1798 = vadd.f32 %v1629, %v1797
    %v1799 = vpop.f32.mrf.mxu0
    %v1800 = vadd.f32 %v1631, %v1799
    %1801 = vdwg.mxu0
    %v1802 = vadd.f32 %v102, %v1643
    %v1803 = vadd.f32 %v103, %v1645
    %v1804 = vadd.f32 %v104, %v1648
    %v1805 = vadd.f32 %v105, %v1650
    %v1806 = vadd.f32 %v106, %v1653
    %v1807 = vadd.f32 %v107, %v1655
    %v1808 = vadd.f32 %v108, %v1658
    %v1809 = vadd.f32 %v109, %v1660
    %v1810 = vadd.f32 %v110, %v1663
    %v1811 = vadd.f32 %v111, %v1665
    %v1812 = vadd.f32 %v112, %v1668
    %v1813 = vadd.f32 %v113, %v1670
    %v1814 = vadd.f32 %v114, %v1673
    %v1815 = vadd.f32 %v115, %v1675
    %v1816 = vadd.f32 %v116, %v1678
    %v1817 = vadd.f32 %v117, %v1680
    %v1818 = vadd.f32 %v118, %v1683
    %v1819 = vadd.f32 %v119, %v1685
    %v1820 = vadd.f32 %v120, %v1688
    %v1821 = vadd.f32 %v121, %v1690
    %v1822 = vadd.f32 %v122, %v1693
    %v1823 = vadd.f32 %v123, %v1695
    %v1824 = vadd.f32 %v124, %v1698
    %v1825 = vadd.f32 %v125, %v1700
    %v1826 = vadd.f32 %v126, %v1703
    %v1827 = vadd.f32 %v127, %v1705
    %v1828 = vadd.f32 %v128, %v1708
    %v1829 = vadd.f32 %v129, %v1710
    %v1830 = vadd.f32 %v130, %v1713
    %v1831 = vadd.f32 %v131, %v1715
    %v1832 = vadd.f32 %v132, %v1718
    %v1833 = vadd.f32 %v133, %v1720
    %v1834 = vadd.f32 %v134, %v1723
    %v1835 = vadd.f32 %v135, %v1725
    %v1836 = vadd.f32 %v136, %v1728
    %v1837 = vadd.f32 %v137, %v1730
    %v1838 = vadd.f32 %v138, %v1733
    %v1839 = vadd.f32 %v139, %v1735
    %v1840 = vadd.f32 %v140, %v1738
    %v1841 = vadd.f32 %v141, %v1740
    %v1842 = vadd.f32 %v142, %v1743
    %v1843 = vadd.f32 %v143, %v1745
    %v1844 = vadd.f32 %v144, %v1748
    %v1845 = vadd.f32 %v145, %v1750
    %v1846 = vadd.f32 %v146, %v1753
    %v1847 = vadd.f32 %v147, %v1755
    %v1848 = vadd.f32 %v148, %v1758
    %v1849 = vadd.f32 %v149, %v1760
    %v1850 = vadd.f32 %v150, %v1763
    %v1851 = vadd.f32 %v151, %v1765
    %v1852 = vadd.f32 %v152, %v1768
    %v1853 = vadd.f32 %v153, %v1770
    %v1854 = vadd.f32 %v154, %v1773
    %v1855 = vadd.f32 %v155, %v1775
    %v1856 = vadd.f32 %v156, %v1778
    %v1857 = vadd.f32 %v157, %v1780
    %v1858 = vadd.f32 %v158, %v1783
    %v1859 = vadd.f32 %v159, %v1785
    %v1860 = vadd.f32 %v160, %v1788
    %v1861 = vadd.f32 %v161, %v1790
    %v1862 = vadd.f32 %v162, %v1793
    %v1863 = vadd.f32 %v163, %v1795
    %v1864 = vadd.f32 %v164, %v1798
    %v1865 = vadd.f32 %v165, %v1800
    %1866 = vst [vmem:[#allocation2] sm:$0xff] %v1802
    %1867 = vst [vmem:[#allocation2 + $0x8] sm:$0xff] %v1803
    %1868 = vst [vmem:[#allocation2 + $0x10] sm:$0xff] %v1804
    %1869 = vst [vmem:[#allocation2 + $0x18] sm:$0xff] %v1805
    %1870 = vst [vmem:[#allocation2 + $0x20] sm:$0xff] %v1806
    %1871 = vst [vmem:[#allocation2 + $0x28] sm:$0xff] %v1807
    %1872 = vst [vmem:[#allocation2 + $0x30] sm:$0xff] %v1808
    %1873 = vst [vmem:[#allocation2 + $0x38] sm:$0xff] %v1809
    %1874 = vst [vmem:[#allocation2 + $0x40] sm:$0xff] %v1810
    %1875 = vst [vmem:[#allocation2 + $0x48] sm:$0xff] %v1811
    %1876 = vst [vmem:[#allocation2 + $0x50] sm:$0xff] %v1812
    %1877 = vst [vmem:[#allocation2 + $0x58] sm:$0xff] %v1813
    %1878 = vst [vmem:[#allocation2 + $0x60] sm:$0xff] %v1814
    %1879 = vst [vmem:[#allocation2 + $0x68] sm:$0xff] %v1815
    %1880 = vst [vmem:[#allocation2 + $0x70] sm:$0xff] %v1816
    %1881 = vst [vmem:[#allocation2 + $0x78] sm:$0xff] %v1817
    %1882 = vst [vmem:[#allocation2 + $0x80] sm:$0xff] %v1818
    %1883 = vst [vmem:[#allocation2 + $0x88] sm:$0xff] %v1819
    %1884 = vst [vmem:[#allocation2 + $0x90] sm:$0xff] %v1820
    %1885 = vst [vmem:[#allocation2 + $0x98] sm:$0xff] %v1821
    %1886 = vst [vmem:[#allocation2 + $0xa0] sm:$0xff] %v1822
    %1887 = vst [vmem:[#allocation2 + $0xa8] sm:$0xff] %v1823
    %1888 = vst [vmem:[#allocation2 + $0xb0] sm:$0xff] %v1824
    %1889 = vst [vmem:[#allocation2 + $0xb8] sm:$0xff] %v1825
    %1890 = vst [vmem:[#allocation2 + $0xc0] sm:$0xff] %v1826
    %1891 = vst [vmem:[#allocation2 + $0xc8] sm:$0xff] %v1827
    %1892 = vst [vmem:[#allocation2 + $0xd0] sm:$0xff] %v1828
    %1893 = vst [vmem:[#allocation2 + $0xd8] sm:$0xff] %v1829
    %1894 = vst [vmem:[#allocation2 + $0xe0] sm:$0xff] %v1830
    %1895 = vst [vmem:[#allocation2 + $0xe8] sm:$0xff] %v1831
    %1896 = vst [vmem:[#allocation2 + $0xf0] sm:$0xff] %v1832
    %1897 = vst [vmem:[#allocation2 + $0xf8] sm:$0xff] %v1833
    %1898 = vst [vmem:[#allocation2 + $0x100] sm:$0xff] %v1834
    %1899 = vst [vmem:[#allocation2 + $0x108] sm:$0xff] %v1835
    %1900 = vst [vmem:[#allocation2 + $0x110] sm:$0xff] %v1836
    %1901 = vst [vmem:[#allocation2 + $0x118] sm:$0xff] %v1837
    %1902 = vst [vmem:[#allocation2 + $0x120] sm:$0xff] %v1838
    %1903 = vst [vmem:[#allocation2 + $0x128] sm:$0xff] %v1839
    %1904 = vst [vmem:[#allocation2 + $0x130] sm:$0xff] %v1840
    %1905 = vst [vmem:[#allocation2 + $0x138] sm:$0xff] %v1841
    %1906 = vst [vmem:[#allocation2 + $0x140] sm:$0xff] %v1842
    %1907 = vst [vmem:[#allocation2 + $0x148] sm:$0xff] %v1843
    %1908 = vst [vmem:[#allocation2 + $0x150] sm:$0xff] %v1844
    %1909 = vst [vmem:[#allocation2 + $0x158] sm:$0xff] %v1845
    %1910 = vst [vmem:[#allocation2 + $0x160] sm:$0xff] %v1846
    %1911 = vst [vmem:[#allocation2 + $0x168] sm:$0xff] %v1847
    %1912 = vst [vmem:[#allocation2 + $0x170] sm:$0xff] %v1848
    %1913 = vst [vmem:[#allocation2 + $0x178] sm:$0xff] %v1849
    %1914 = vst [vmem:[#allocation2 + $0x180] sm:$0xff] %v1850
    %1915 = vst [vmem:[#allocation2 + $0x188] sm:$0xff] %v1851
    %1916 = vst [vmem:[#allocation2 + $0x190] sm:$0xff] %v1852
    %1917 = vst [vmem:[#allocation2 + $0x198] sm:$0xff] %v1853
    %1918 = vst [vmem:[#allocation2 + $0x1a0] sm:$0xff] %v1854
    %1919 = vst [vmem:[#allocation2 + $0x1a8] sm:$0xff] %v1855
    %1920 = vst [vmem:[#allocation2 + $0x1b0] sm:$0xff] %v1856
    %1921 = vst [vmem:[#allocation2 + $0x1b8] sm:$0xff] %v1857
    %1922 = vst [vmem:[#allocation2 + $0x1c0] sm:$0xff] %v1858
    %1923 = vst [vmem:[#allocation2 + $0x1c8] sm:$0xff] %v1859
    %1924 = vst [vmem:[#allocation2 + $0x1d0] sm:$0xff] %v1860
    %1925 = vst [vmem:[#allocation2 + $0x1d8] sm:$0xff] %v1861
    %1926 = vst [vmem:[#allocation2 + $0x1e0] sm:$0xff] %v1862
    %1927 = vst [vmem:[#allocation2 + $0x1e8] sm:$0xff] %v1863
    %1928 = vst [vmem:[#allocation2 + $0x1f0] sm:$0xff] %v1864
    %1929 = vst [vmem:[#allocation2 + $0x1f8] sm:$0xff] %v1865
    // Predicated region
    $region26: #{tpu_custom_call.1} parent=1 // pred_check
      %p1930 = pneg %p34
    $region27: #{tpu_custom_call.1} parent=1 // pred_check_branch
      %1932 = sbr.rel (%p1930) target = $region29
    $region28: #{tpu_custom_call.1} parent=1 // pred_region
      %v1933 = vld [vmem:[#allocation2] sm:$0xff]
      %v1934 = vld [vmem:[#allocation2 + $0x8] sm:$0xff]
      %v1935 = vld [vmem:[#allocation2 + $0x10] sm:$0xff]
      %v1936 = vld [vmem:[#allocation2 + $0x18] sm:$0xff]
      %v1937 = vld [vmem:[#allocation2 + $0x20] sm:$0xff]
      %v1938 = vld [vmem:[#allocation2 + $0x28] sm:$0xff]
      %v1939 = vld [vmem:[#allocation2 + $0x30] sm:$0xff]
      %v1940 = vld [vmem:[#allocation2 + $0x38] sm:$0xff]
      %v1941 = vld [vmem:[#allocation2 + $0x40] sm:$0xff]
      %v1942 = vld [vmem:[#allocation2 + $0x48] sm:$0xff]
      %v1943 = vld [vmem:[#allocation2 + $0x50] sm:$0xff]
      %v1944 = vld [vmem:[#allocation2 + $0x58] sm:$0xff]
      %v1945 = vld [vmem:[#allocation2 + $0x60] sm:$0xff]
      %v1946 = vld [vmem:[#allocation2 + $0x68] sm:$0xff]
      %v1947 = vld [vmem:[#allocation2 + $0x70] sm:$0xff]
      %v1948 = vld [vmem:[#allocation2 + $0x78] sm:$0xff]
      %v1949 = vld [vmem:[#allocation2 + $0x80] sm:$0xff]
      %v1950 = vld [vmem:[#allocation2 + $0x88] sm:$0xff]
      %v1951 = vld [vmem:[#allocation2 + $0x90] sm:$0xff]
      %v1952 = vld [vmem:[#allocation2 + $0x98] sm:$0xff]
      %v1953 = vld [vmem:[#allocation2 + $0xa0] sm:$0xff]
      %v1954 = vld [vmem:[#allocation2 + $0xa8] sm:$0xff]
      %v1955 = vld [vmem:[#allocation2 + $0xb0] sm:$0xff]
      %v1956 = vld [vmem:[#allocation2 + $0xb8] sm:$0xff]
      %v1957 = vld [vmem:[#allocation2 + $0xc0] sm:$0xff]
      %v1958 = vld [vmem:[#allocation2 + $0xc8] sm:$0xff]
      %v1959 = vld [vmem:[#allocation2 + $0xd0] sm:$0xff]
      %v1960 = vld [vmem:[#allocation2 + $0xd8] sm:$0xff]
      %v1961 = vld [vmem:[#allocation2 + $0xe0] sm:$0xff]
      %v1962 = vld [vmem:[#allocation2 + $0xe8] sm:$0xff]
      %v1963 = vld [vmem:[#allocation2 + $0xf0] sm:$0xff]
      %v1964 = vld [vmem:[#allocation2 + $0xf8] sm:$0xff]
      %v1965 = vld [vmem:[#allocation2 + $0x100] sm:$0xff]
      %v1966 = vld [vmem:[#allocation2 + $0x108] sm:$0xff]
      %v1967 = vld [vmem:[#allocation2 + $0x110] sm:$0xff]
      %v1968 = vld [vmem:[#allocation2 + $0x118] sm:$0xff]
      %v1969 = vld [vmem:[#allocation2 + $0x120] sm:$0xff]
      %v1970 = vld [vmem:[#allocation2 + $0x128] sm:$0xff]
      %v1971 = vld [vmem:[#allocation2 + $0x130] sm:$0xff]
      %v1972 = vld [vmem:[#allocation2 + $0x138] sm:$0xff]
      %v1973 = vld [vmem:[#allocation2 + $0x140] sm:$0xff]
      %v1974 = vld [vmem:[#allocation2 + $0x148] sm:$0xff]
      %v1975 = vld [vmem:[#allocation2 + $0x150] sm:$0xff]
      %v1976 = vld [vmem:[#allocation2 + $0x158] sm:$0xff]
      %v1977 = vld [vmem:[#allocation2 + $0x160] sm:$0xff]
      %v1978 = vld [vmem:[#allocation2 + $0x168] sm:$0xff]
      %v1979 = vld [vmem:[#allocation2 + $0x170] sm:$0xff]
      %v1980 = vld [vmem:[#allocation2 + $0x178] sm:$0xff]
      %v1981 = vld [vmem:[#allocation2 + $0x180] sm:$0xff]
      %v1982 = vld [vmem:[#allocation2 + $0x188] sm:$0xff]
      %v1983 = vld [vmem:[#allocation2 + $0x190] sm:$0xff]
      %v1984 = vld [vmem:[#allocation2 + $0x198] sm:$0xff]
      %v1985 = vld [vmem:[#allocation2 + $0x1a0] sm:$0xff]
      %v1986 = vld [vmem:[#allocation2 + $0x1a8] sm:$0xff]
      %v1987 = vld [vmem:[#allocation2 + $0x1b0] sm:$0xff]
      %v1988 = vld [vmem:[#allocation2 + $0x1b8] sm:$0xff]
      %v1989 = vld [vmem:[#allocation2 + $0x1c0] sm:$0xff]
      %v1990 = vld [vmem:[#allocation2 + $0x1c8] sm:$0xff]
      %v1991 = vld [vmem:[#allocation2 + $0x1d0] sm:$0xff]
      %v1992 = vld [vmem:[#allocation2 + $0x1d8] sm:$0xff]
      %v1993 = vld [vmem:[#allocation2 + $0x1e0] sm:$0xff]
      %v1994 = vld [vmem:[#allocation2 + $0x1e8] sm:$0xff]
      %v1995 = vld [vmem:[#allocation2 + $0x1f0] sm:$0xff]
      %v1996 = vld [vmem:[#allocation2 + $0x1f8] sm:$0xff]
      %v1997 = vld [vmem:[%s2] sm:$0xff]
      %v1998 = vld [vmem:[%s2 + $0x8] sm:$0xff]
      %v1999 = vld [vmem:[%s2 + $0x10] sm:$0xff]
      %v2000 = vld [vmem:[%s2 + $0x18] sm:$0xff]
      %v2001 = vld [vmem:[%s2 + $0x20] sm:$0xff]
      %v2002 = vld [vmem:[%s2 + $0x28] sm:$0xff]
      %v2003 = vld [vmem:[%s2 + $0x30] sm:$0xff]
      %v2004 = vld [vmem:[%s2 + $0x38] sm:$0xff]
      %v2005 = vld [vmem:[%s2 + $0x40] sm:$0xff]
      %v2006 = vld [vmem:[%s2 + $0x48] sm:$0xff]
      %v2007 = vld [vmem:[%s2 + $0x50] sm:$0xff]
      %v2008 = vld [vmem:[%s2 + $0x58] sm:$0xff]
      %v2009 = vld [vmem:[%s2 + $0x60] sm:$0xff]
      %v2010 = vld [vmem:[%s2 + $0x68] sm:$0xff]
      %v2011 = vld [vmem:[%s2 + $0x70] sm:$0xff]
      %v2012 = vld [vmem:[%s2 + $0x78] sm:$0xff]
      %v2013 = vld [vmem:[%s2 + $0x80] sm:$0xff]
      %v2014 = vld [vmem:[%s2 + $0x88] sm:$0xff]
      %v2015 = vld [vmem:[%s2 + $0x90] sm:$0xff]
      %v2016 = vld [vmem:[%s2 + $0x98] sm:$0xff]
      %v2017 = vld [vmem:[%s2 + $0xa0] sm:$0xff]
      %v2018 = vld [vmem:[%s2 + $0xa8] sm:$0xff]
      %v2019 = vld [vmem:[%s2 + $0xb0] sm:$0xff]
      %v2020 = vld [vmem:[%s2 + $0xb8] sm:$0xff]
      %v2021 = vld [vmem:[%s2 + $0xc0] sm:$0xff]
      %v2022 = vld [vmem:[%s2 + $0xc8] sm:$0xff]
      %v2023 = vld [vmem:[%s2 + $0xd0] sm:$0xff]
      %v2024 = vld [vmem:[%s2 + $0xd8] sm:$0xff]
      %v2025 = vld [vmem:[%s2 + $0xe0] sm:$0xff]
      %v2026 = vld [vmem:[%s2 + $0xe8] sm:$0xff]
      %v2027 = vld [vmem:[%s2 + $0xf0] sm:$0xff]
      %v2028 = vld [vmem:[%s2 + $0xf8] sm:$0xff]
      %v2029 = vld [vmem:[%s2 + $0x100] sm:$0xff]
      %v2030 = vld [vmem:[%s2 + $0x108] sm:$0xff]
      %v2031 = vld [vmem:[%s2 + $0x110] sm:$0xff]
      %v2032 = vld [vmem:[%s2 + $0x118] sm:$0xff]
      %v2033 = vld [vmem:[%s2 + $0x120] sm:$0xff]
      %v2034 = vld [vmem:[%s2 + $0x128] sm:$0xff]
      %v2035 = vld [vmem:[%s2 + $0x130] sm:$0xff]
      %v2036 = vld [vmem:[%s2 + $0x138] sm:$0xff]
      %v2037 = vld [vmem:[%s2 + $0x140] sm:$0xff]
      %v2038 = vld [vmem:[%s2 + $0x148] sm:$0xff]
      %v2039 = vld [vmem:[%s2 + $0x150] sm:$0xff]
      %v2040 = vld [vmem:[%s2 + $0x158] sm:$0xff]
      %v2041 = vld [vmem:[%s2 + $0x160] sm:$0xff]
      %v2042 = vld [vmem:[%s2 + $0x168] sm:$0xff]
      %v2043 = vld [vmem:[%s2 + $0x170] sm:$0xff]
      %v2044 = vld [vmem:[%s2 + $0x178] sm:$0xff]
      %v2045 = vld [vmem:[%s2 + $0x180] sm:$0xff]
      %v2046 = vld [vmem:[%s2 + $0x188] sm:$0xff]
      %v2047 = vld [vmem:[%s2 + $0x190] sm:$0xff]
      %v2048 = vld [vmem:[%s2 + $0x198] sm:$0xff]
      %v2049 = vld [vmem:[%s2 + $0x1a0] sm:$0xff]
      %v2050 = vld [vmem:[%s2 + $0x1a8] sm:$0xff]
      %v2051 = vld [vmem:[%s2 + $0x1b0] sm:$0xff]
      %v2052 = vld [vmem:[%s2 + $0x1b8] sm:$0xff]
      %v2053 = vld [vmem:[%s2 + $0x1c0] sm:$0xff]
      %v2054 = vld [vmem:[%s2 + $0x1c8] sm:$0xff]
      %v2055 = vld [vmem:[%s2 + $0x1d0] sm:$0xff]
      %v2056 = vld [vmem:[%s2 + $0x1d8] sm:$0xff]
      %v2057 = vld [vmem:[%s2 + $0x1e0] sm:$0xff]
      %v2058 = vld [vmem:[%s2 + $0x1e8] sm:$0xff]
      %v2059 = vld [vmem:[%s2 + $0x1f0] sm:$0xff]
      %v2060 = vld [vmem:[%s2 + $0x1f8] sm:$0xff]
      %2062 = vset.pattern.permute.xlu0 0
      %2063 = vperm.xlu0 %2062, %v1997
      %v2064 = vpop.permute.xlu0 %2063
      %2067 = vset.pattern.permute.xlu0 0
      %2068 = vperm.xlu0 %2067, %v1998
      %v2069 = vpop.permute.xlu0 %2068
      %2072 = vset.pattern.permute.xlu0 0
      %2073 = vperm.xlu0 %2072, %v1999
      %v2074 = vpop.permute.xlu0 %2073
      %2077 = vset.pattern.permute.xlu0 0
      %2078 = vperm.xlu0 %2077, %v2000
      %v2079 = vpop.permute.xlu0 %2078
      %2082 = vset.pattern.permute.xlu0 0
      %2083 = vperm.xlu0 %2082, %v2001
      %v2084 = vpop.permute.xlu0 %2083
      %2087 = vset.pattern.permute.xlu0 0
      %2088 = vperm.xlu0 %2087, %v2002
      %v2089 = vpop.permute.xlu0 %2088
      %2092 = vset.pattern.permute.xlu0 0
      %2093 = vperm.xlu0 %2092, %v2003
      %v2094 = vpop.permute.xlu0 %2093
      %2097 = vset.pattern.permute.xlu0 0
      %2098 = vperm.xlu0 %2097, %v2004
      %v2099 = vpop.permute.xlu0 %2098
      %2102 = vset.pattern.permute.xlu0 0
      %2103 = vperm.xlu0 %2102, %v2005
      %v2104 = vpop.permute.xlu0 %2103
      %2107 = vset.pattern.permute.xlu0 0
      %2108 = vperm.xlu0 %2107, %v2006
      %v2109 = vpop.permute.xlu0 %2108
      %2112 = vset.pattern.permute.xlu0 0
      %2113 = vperm.xlu0 %2112, %v2007
      %v2114 = vpop.permute.xlu0 %2113
      %2117 = vset.pattern.permute.xlu0 0
      %2118 = vperm.xlu0 %2117, %v2008
      %v2119 = vpop.permute.xlu0 %2118
      %2122 = vset.pattern.permute.xlu0 0
      %2123 = vperm.xlu0 %2122, %v2009
      %v2124 = vpop.permute.xlu0 %2123
      %2127 = vset.pattern.permute.xlu0 0
      %2128 = vperm.xlu0 %2127, %v2010
      %v2129 = vpop.permute.xlu0 %2128
      %2132 = vset.pattern.permute.xlu0 0
      %2133 = vperm.xlu0 %2132, %v2011
      %v2134 = vpop.permute.xlu0 %2133
      %2137 = vset.pattern.permute.xlu0 0
      %2138 = vperm.xlu0 %2137, %v2012
      %v2139 = vpop.permute.xlu0 %2138
      %2142 = vset.pattern.permute.xlu0 0
      %2143 = vperm.xlu0 %2142, %v2013
      %v2144 = vpop.permute.xlu0 %2143
      %2147 = vset.pattern.permute.xlu0 0
      %2148 = vperm.xlu0 %2147, %v2014
      %v2149 = vpop.permute.xlu0 %2148
      %2152 = vset.pattern.permute.xlu0 0
      %2153 = vperm.xlu0 %2152, %v2015
      %v2154 = vpop.permute.xlu0 %2153
      %2157 = vset.pattern.permute.xlu0 0
      %2158 = vperm.xlu0 %2157, %v2016
      %v2159 = vpop.permute.xlu0 %2158
      %2162 = vset.pattern.permute.xlu0 0
      %2163 = vperm.xlu0 %2162, %v2017
      %v2164 = vpop.permute.xlu0 %2163
      %2167 = vset.pattern.permute.xlu0 0
      %2168 = vperm.xlu0 %2167, %v2018
      %v2169 = vpop.permute.xlu0 %2168
      %2172 = vset.pattern.permute.xlu0 0
      %2173 = vperm.xlu0 %2172, %v2019
      %v2174 = vpop.permute.xlu0 %2173
      %2177 = vset.pattern.permute.xlu0 0
      %2178 = vperm.xlu0 %2177, %v2020
      %v2179 = vpop.permute.xlu0 %2178
      %2182 = vset.pattern.permute.xlu0 0
      %2183 = vperm.xlu0 %2182, %v2021
      %v2184 = vpop.permute.xlu0 %2183
      %2187 = vset.pattern.permute.xlu0 0
      %2188 = vperm.xlu0 %2187, %v2022
      %v2189 = vpop.permute.xlu0 %2188
      %2192 = vset.pattern.permute.xlu0 0
      %2193 = vperm.xlu0 %2192, %v2023
      %v2194 = vpop.permute.xlu0 %2193
      %2197 = vset.pattern.permute.xlu0 0
      %2198 = vperm.xlu0 %2197, %v2024
      %v2199 = vpop.permute.xlu0 %2198
      %2202 = vset.pattern.permute.xlu0 0
      %2203 = vperm.xlu0 %2202, %v2025
      %v2204 = vpop.permute.xlu0 %2203
      %2207 = vset.pattern.permute.xlu0 0
      %2208 = vperm.xlu0 %2207, %v2026
      %v2209 = vpop.permute.xlu0 %2208
      %2212 = vset.pattern.permute.xlu0 0
      %2213 = vperm.xlu0 %2212, %v2027
      %v2214 = vpop.permute.xlu0 %2213
      %2217 = vset.pattern.permute.xlu0 0
      %2218 = vperm.xlu0 %2217, %v2028
      %v2219 = vpop.permute.xlu0 %2218
      %2222 = vset.pattern.permute.xlu0 0
      %2223 = vperm.xlu0 %2222, %v2029
      %v2224 = vpop.permute.xlu0 %2223
      %2227 = vset.pattern.permute.xlu0 0
      %2228 = vperm.xlu0 %2227, %v2030
      %v2229 = vpop.permute.xlu0 %2228
      %2232 = vset.pattern.permute.xlu0 0
      %2233 = vperm.xlu0 %2232, %v2031
      %v2234 = vpop.permute.xlu0 %2233
      %2237 = vset.pattern.permute.xlu0 0
      %2238 = vperm.xlu0 %2237, %v2032
      %v2239 = vpop.permute.xlu0 %2238
      %2242 = vset.pattern.permute.xlu0 0
      %2243 = vperm.xlu0 %2242, %v2033
      %v2244 = vpop.permute.xlu0 %2243
      %2247 = vset.pattern.permute.xlu0 0
      %2248 = vperm.xlu0 %2247, %v2034
      %v2249 = vpop.permute.xlu0 %2248
      %2252 = vset.pattern.permute.xlu0 0
      %2253 = vperm.xlu0 %2252, %v2035
      %v2254 = vpop.permute.xlu0 %2253
      %2257 = vset.pattern.permute.xlu0 0
      %2258 = vperm.xlu0 %2257, %v2036
      %v2259 = vpop.permute.xlu0 %2258
      %2262 = vset.pattern.permute.xlu0 0
      %2263 = vperm.xlu0 %2262, %v2037
      %v2264 = vpop.permute.xlu0 %2263
      %2267 = vset.pattern.permute.xlu0 0
      %2268 = vperm.xlu0 %2267, %v2038
      %v2269 = vpop.permute.xlu0 %2268
      %2272 = vset.pattern.permute.xlu0 0
      %2273 = vperm.xlu0 %2272, %v2039
      %v2274 = vpop.permute.xlu0 %2273
      %2277 = vset.pattern.permute.xlu0 0
      %2278 = vperm.xlu0 %2277, %v2040
      %v2279 = vpop.permute.xlu0 %2278
      %2282 = vset.pattern.permute.xlu0 0
      %2283 = vperm.xlu0 %2282, %v2041
      %v2284 = vpop.permute.xlu0 %2283
      %2287 = vset.pattern.permute.xlu0 0
      %2288 = vperm.xlu0 %2287, %v2042
      %v2289 = vpop.permute.xlu0 %2288
      %2292 = vset.pattern.permute.xlu0 0
      %2293 = vperm.xlu0 %2292, %v2043
      %v2294 = vpop.permute.xlu0 %2293
      %2297 = vset.pattern.permute.xlu0 0
      %2298 = vperm.xlu0 %2297, %v2044
      %v2299 = vpop.permute.xlu0 %2298
      %2302 = vset.pattern.permute.xlu0 0
      %2303 = vperm.xlu0 %2302, %v2045
      %v2304 = vpop.permute.xlu0 %2303
      %2307 = vset.pattern.permute.xlu0 0
      %2308 = vperm.xlu0 %2307, %v2046
      %v2309 = vpop.permute.xlu0 %2308
      %2312 = vset.pattern.permute.xlu0 0
      %2313 = vperm.xlu0 %2312, %v2047
      %v2314 = vpop.permute.xlu0 %2313
      %2317 = vset.pattern.permute.xlu0 0
      %2318 = vperm.xlu0 %2317, %v2048
      %v2319 = vpop.permute.xlu0 %2318
      %2322 = vset.pattern.permute.xlu0 0
      %2323 = vperm.xlu0 %2322, %v2049
      %v2324 = vpop.permute.xlu0 %2323
      %2327 = vset.pattern.permute.xlu0 0
      %2328 = vperm.xlu0 %2327, %v2050
      %v2329 = vpop.permute.xlu0 %2328
      %2332 = vset.pattern.permute.xlu0 0
      %2333 = vperm.xlu0 %2332, %v2051
      %v2334 = vpop.permute.xlu0 %2333
      %2337 = vset.pattern.permute.xlu0 0
      %2338 = vperm.xlu0 %2337, %v2052
      %v2339 = vpop.permute.xlu0 %2338
      %2342 = vset.pattern.permute.xlu0 0
      %2343 = vperm.xlu0 %2342, %v2053
      %v2344 = vpop.permute.xlu0 %2343
      %2347 = vset.pattern.permute.xlu0 0
      %2348 = vperm.xlu0 %2347, %v2054
      %v2349 = vpop.permute.xlu0 %2348
      %2352 = vset.pattern.permute.xlu0 0
      %2353 = vperm.xlu0 %2352, %v2055
      %v2354 = vpop.permute.xlu0 %2353
      %2357 = vset.pattern.permute.xlu0 0
      %2358 = vperm.xlu0 %2357, %v2056
      %v2359 = vpop.permute.xlu0 %2358
      %2362 = vset.pattern.permute.xlu0 0
      %2363 = vperm.xlu0 %2362, %v2057
      %v2364 = vpop.permute.xlu0 %2363
      %2367 = vset.pattern.permute.xlu0 0
      %2368 = vperm.xlu0 %2367, %v2058
      %v2369 = vpop.permute.xlu0 %2368
      %2372 = vset.pattern.permute.xlu0 0
      %2373 = vperm.xlu0 %2372, %v2059
      %v2374 = vpop.permute.xlu0 %2373
      %2377 = vset.pattern.permute.xlu0 0
      %2378 = vperm.xlu0 %2377, %v2060
      %v2379 = vpop.permute.xlu0 %2378
      %v2381 = vmul.f32 %v1933, %v2064
      %v2382 = vmul.f32 %v1934, %v2069
      %v2383 = vmul.f32 %v1935, %v2074
      %v2384 = vmul.f32 %v1936, %v2079
      %v2385 = vmul.f32 %v1937, %v2084
      %v2386 = vmul.f32 %v1938, %v2089
      %v2387 = vmul.f32 %v1939, %v2094
      %v2388 = vmul.f32 %v1940, %v2099
      %v2389 = vmul.f32 %v1941, %v2104
      %v2390 = vmul.f32 %v1942, %v2109
      %v2391 = vmul.f32 %v1943, %v2114
      %v2392 = vmul.f32 %v1944, %v2119
      %v2393 = vmul.f32 %v1945, %v2124
      %v2394 = vmul.f32 %v1946, %v2129
      %v2395 = vmul.f32 %v1947, %v2134
      %v2396 = vmul.f32 %v1948, %v2139
      %v2397 = vmul.f32 %v1949, %v2144
      %v2398 = vmul.f32 %v1950, %v2149
      %v2399 = vmul.f32 %v1951, %v2154
      %v2400 = vmul.f32 %v1952, %v2159
      %v2401 = vmul.f32 %v1953, %v2164
      %v2402 = vmul.f32 %v1954, %v2169
      %v2403 = vmul.f32 %v1955, %v2174
      %v2404 = vmul.f32 %v1956, %v2179
      %v2405 = vmul.f32 %v1957, %v2184
      %v2406 = vmul.f32 %v1958, %v2189
      %v2407 = vmul.f32 %v1959, %v2194
      %v2408 = vmul.f32 %v1960, %v2199
      %v2409 = vmul.f32 %v1961, %v2204
      %v2410 = vmul.f32 %v1962, %v2209
      %v2411 = vmul.f32 %v1963, %v2214
      %v2412 = vmul.f32 %v1964, %v2219
      %v2413 = vmul.f32 %v1965, %v2224
      %v2414 = vmul.f32 %v1966, %v2229
      %v2415 = vmul.f32 %v1967, %v2234
      %v2416 = vmul.f32 %v1968, %v2239
      %v2417 = vmul.f32 %v1969, %v2244
      %v2418 = vmul.f32 %v1970, %v2249
      %v2419 = vmul.f32 %v1971, %v2254
      %v2420 = vmul.f32 %v1972, %v2259
      %v2421 = vmul.f32 %v1973, %v2264
      %v2422 = vmul.f32 %v1974, %v2269
      %v2423 = vmul.f32 %v1975, %v2274
      %v2424 = vmul.f32 %v1976, %v2279
      %v2425 = vmul.f32 %v1977, %v2284
      %v2426 = vmul.f32 %v1978, %v2289
      %v2427 = vmul.f32 %v1979, %v2294
      %v2428 = vmul.f32 %v1980, %v2299
      %v2429 = vmul.f32 %v1981, %v2304
      %v2430 = vmul.f32 %v1982, %v2309
      %v2431 = vmul.f32 %v1983, %v2314
      %v2432 = vmul.f32 %v1984, %v2319
      %v2433 = vmul.f32 %v1985, %v2324
      %v2434 = vmul.f32 %v1986, %v2329
      %v2435 = vmul.f32 %v1987, %v2334
      %v2436 = vmul.f32 %v1988, %v2339
      %v2437 = vmul.f32 %v1989, %v2344
      %v2438 = vmul.f32 %v1990, %v2349
      %v2439 = vmul.f32 %v1991, %v2354
      %v2440 = vmul.f32 %v1992, %v2359
      %v2441 = vmul.f32 %v1993, %v2364
      %v2442 = vmul.f32 %v1994, %v2369
      %v2443 = vmul.f32 %v1995, %v2374
      %v2444 = vmul.f32 %v1996, %v2379
      %v2445 = vld [vmem:[%s3] sm:$0x1]
      %v2447 = vperm.slane %v2445, 0
      %v2449 = vadd.f32 %v2381, %v2447
      %v2450 = vadd.f32 %v2382, %v2447
      %v2451 = vadd.f32 %v2383, %v2447
      %v2452 = vadd.f32 %v2384, %v2447
      %v2453 = vadd.f32 %v2385, %v2447
      %v2454 = vadd.f32 %v2386, %v2447
      %v2455 = vadd.f32 %v2387, %v2447
      %v2456 = vadd.f32 %v2388, %v2447
      %v2457 = vadd.f32 %v2389, %v2447
      %v2458 = vadd.f32 %v2390, %v2447
      %v2459 = vadd.f32 %v2391, %v2447
      %v2460 = vadd.f32 %v2392, %v2447
      %v2461 = vadd.f32 %v2393, %v2447
      %v2462 = vadd.f32 %v2394, %v2447
      %v2463 = vadd.f32 %v2395, %v2447
      %v2464 = vadd.f32 %v2396, %v2447
      %v2465 = vadd.f32 %v2397, %v2447
      %v2466 = vadd.f32 %v2398, %v2447
      %v2467 = vadd.f32 %v2399, %v2447
      %v2468 = vadd.f32 %v2400, %v2447
      %v2469 = vadd.f32 %v2401, %v2447
      %v2470 = vadd.f32 %v2402, %v2447
      %v2471 = vadd.f32 %v2403, %v2447
      %v2472 = vadd.f32 %v2404, %v2447
      %v2473 = vadd.f32 %v2405, %v2447
      %v2474 = vadd.f32 %v2406, %v2447
      %v2475 = vadd.f32 %v2407, %v2447
      %v2476 = vadd.f32 %v2408, %v2447
      %v2477 = vadd.f32 %v2409, %v2447
      %v2478 = vadd.f32 %v2410, %v2447
      %v2479 = vadd.f32 %v2411, %v2447
      %v2480 = vadd.f32 %v2412, %v2447
      %v2481 = vadd.f32 %v2413, %v2447
      %v2482 = vadd.f32 %v2414, %v2447
      %v2483 = vadd.f32 %v2415, %v2447
      %v2484 = vadd.f32 %v2416, %v2447
      %v2485 = vadd.f32 %v2417, %v2447
      %v2486 = vadd.f32 %v2418, %v2447
      %v2487 = vadd.f32 %v2419, %v2447
      %v2488 = vadd.f32 %v2420, %v2447
      %v2489 = vadd.f32 %v2421, %v2447
      %v2490 = vadd.f32 %v2422, %v2447
      %v2491 = vadd.f32 %v2423, %v2447
      %v2492 = vadd.f32 %v2424, %v2447
      %v2493 = vadd.f32 %v2425, %v2447
      %v2494 = vadd.f32 %v2426, %v2447
      %v2495 = vadd.f32 %v2427, %v2447
      %v2496 = vadd.f32 %v2428, %v2447
      %v2497 = vadd.f32 %v2429, %v2447
      %v2498 = vadd.f32 %v2430, %v2447
      %v2499 = vadd.f32 %v2431, %v2447
      %v2500 = vadd.f32 %v2432, %v2447
      %v2501 = vadd.f32 %v2433, %v2447
      %v2502 = vadd.f32 %v2434, %v2447
      %v2503 = vadd.f32 %v2435, %v2447
      %v2504 = vadd.f32 %v2436, %v2447
      %v2505 = vadd.f32 %v2437, %v2447
      %v2506 = vadd.f32 %v2438, %v2447
      %v2507 = vadd.f32 %v2439, %v2447
      %v2508 = vadd.f32 %v2440, %v2447
      %v2509 = vadd.f32 %v2441, %v2447
      %v2510 = vadd.f32 %v2442, %v2447
      %v2511 = vadd.f32 %v2443, %v2447
      %v2512 = vadd.f32 %v2444, %v2447
      %v2513 = vmax.f32 %v2449, 0.0
      %v2514 = vmax.f32 %v2450, 0.0
      %v2515 = vmax.f32 %v2451, 0.0
      %v2516 = vmax.f32 %v2452, 0.0
      %v2517 = vmax.f32 %v2453, 0.0
      %v2518 = vmax.f32 %v2454, 0.0
      %v2519 = vmax.f32 %v2455, 0.0
      %v2520 = vmax.f32 %v2456, 0.0
      %v2521 = vmax.f32 %v2457, 0.0
      %v2522 = vmax.f32 %v2458, 0.0
      %v2523 = vmax.f32 %v2459, 0.0
      %v2524 = vmax.f32 %v2460, 0.0
      %v2525 = vmax.f32 %v2461, 0.0
      %v2526 = vmax.f32 %v2462, 0.0
      %v2527 = vmax.f32 %v2463, 0.0
      %v2528 = vmax.f32 %v2464, 0.0
      %v2529 = vmax.f32 %v2465, 0.0
      %v2530 = vmax.f32 %v2466, 0.0
      %v2531 = vmax.f32 %v2467, 0.0
      %v2532 = vmax.f32 %v2468, 0.0
      %v2533 = vmax.f32 %v2469, 0.0
      %v2534 = vmax.f32 %v2470, 0.0
      %v2535 = vmax.f32 %v2471, 0.0
      %v2536 = vmax.f32 %v2472, 0.0
      %v2537 = vmax.f32 %v2473, 0.0
      %v2538 = vmax.f32 %v2474, 0.0
      %v2539 = vmax.f32 %v2475, 0.0
      %v2540 = vmax.f32 %v2476, 0.0
      %v2541 = vmax.f32 %v2477, 0.0
      %v2542 = vmax.f32 %v2478, 0.0
      %v2543 = vmax.f32 %v2479, 0.0
      %v2544 = vmax.f32 %v2480, 0.0
      %v2545 = vmax.f32 %v2481, 0.0
      %v2546 = vmax.f32 %v2482, 0.0
      %v2547 = vmax.f32 %v2483, 0.0
      %v2548 = vmax.f32 %v2484, 0.0
      %v2549 = vmax.f32 %v2485, 0.0
      %v2550 = vmax.f32 %v2486, 0.0
      %v2551 = vmax.f32 %v2487, 0.0
      %v2552 = vmax.f32 %v2488, 0.0
      %v2553 = vmax.f32 %v2489, 0.0
      %v2554 = vmax.f32 %v2490, 0.0
      %v2555 = vmax.f32 %v2491, 0.0
      %v2556 = vmax.f32 %v2492, 0.0
      %v2557 = vmax.f32 %v2493, 0.0
      %v2558 = vmax.f32 %v2494, 0.0
      %v2559 = vmax.f32 %v2495, 0.0
      %v2560 = vmax.f32 %v2496, 0.0
      %v2561 = vmax.f32 %v2497, 0.0
      %v2562 = vmax.f32 %v2498, 0.0
      %v2563 = vmax.f32 %v2499, 0.0
      %v2564 = vmax.f32 %v2500, 0.0
      %v2565 = vmax.f32 %v2501, 0.0
      %v2566 = vmax.f32 %v2502, 0.0
      %v2567 = vmax.f32 %v2503, 0.0
      %v2568 = vmax.f32 %v2504, 0.0
      %v2569 = vmax.f32 %v2505, 0.0
      %v2570 = vmax.f32 %v2506, 0.0
      %v2571 = vmax.f32 %v2507, 0.0
      %v2572 = vmax.f32 %v2508, 0.0
      %v2573 = vmax.f32 %v2509, 0.0
      %v2574 = vmax.f32 %v2510, 0.0
      %v2575 = vmax.f32 %v2511, 0.0
      %v2576 = vmax.f32 %v2512, 0.0
      %2577 = vst [vmem:[#allocation6] sm:$0xff] %v2513
      %2578 = vst [vmem:[#allocation6 + $0x8] sm:$0xff] %v2514
      %2579 = vst [vmem:[#allocation6 + $0x10] sm:$0xff] %v2515
      %2580 = vst [vmem:[#allocation6 + $0x18] sm:$0xff] %v2516
      %2581 = vst [vmem:[#allocation6 + $0x20] sm:$0xff] %v2517
      %2582 = vst [vmem:[#allocation6 + $0x28] sm:$0xff] %v2518
      %2583 = vst [vmem:[#allocation6 + $0x30] sm:$0xff] %v2519
      %2584 = vst [vmem:[#allocation6 + $0x38] sm:$0xff] %v2520
      %2585 = vst [vmem:[#allocation6 + $0x40] sm:$0xff] %v2521
      %2586 = vst [vmem:[#allocation6 + $0x48] sm:$0xff] %v2522
      %2587 = vst [vmem:[#allocation6 + $0x50] sm:$0xff] %v2523
      %2588 = vst [vmem:[#allocation6 + $0x58] sm:$0xff] %v2524
      %2589 = vst [vmem:[#allocation6 + $0x60] sm:$0xff] %v2525
      %2590 = vst [vmem:[#allocation6 + $0x68] sm:$0xff] %v2526
      %2591 = vst [vmem:[#allocation6 + $0x70] sm:$0xff] %v2527
      %2592 = vst [vmem:[#allocation6 + $0x78] sm:$0xff] %v2528
      %2593 = vst [vmem:[#allocation6 + $0x80] sm:$0xff] %v2529
      %2594 = vst [vmem:[#allocation6 + $0x88] sm:$0xff] %v2530
      %2595 = vst [vmem:[#allocation6 + $0x90] sm:$0xff] %v2531
      %2596 = vst [vmem:[#allocation6 + $0x98] sm:$0xff] %v2532
      %2597 = vst [vmem:[#allocation6 + $0xa0] sm:$0xff] %v2533
      %2598 = vst [vmem:[#allocation6 + $0xa8] sm:$0xff] %v2534
      %2599 = vst [vmem:[#allocation6 + $0xb0] sm:$0xff] %v2535
      %2600 = vst [vmem:[#allocation6 + $0xb8] sm:$0xff] %v2536
      %2601 = vst [vmem:[#allocation6 + $0xc0] sm:$0xff] %v2537
      %2602 = vst [vmem:[#allocation6 + $0xc8] sm:$0xff] %v2538
      %2603 = vst [vmem:[#allocation6 + $0xd0] sm:$0xff] %v2539
      %2604 = vst [vmem:[#allocation6 + $0xd8] sm:$0xff] %v2540
      %2605 = vst [vmem:[#allocation6 + $0xe0] sm:$0xff] %v2541
      %2606 = vst [vmem:[#allocation6 + $0xe8] sm:$0xff] %v2542
      %2607 = vst [vmem:[#allocation6 + $0xf0] sm:$0xff] %v2543
      %2608 = vst [vmem:[#allocation6 + $0xf8] sm:$0xff] %v2544
      %2609 = vst [vmem:[#allocation6 + $0x100] sm:$0xff] %v2545
      %2610 = vst [vmem:[#allocation6 + $0x108] sm:$0xff] %v2546
      %2611 = vst [vmem:[#allocation6 + $0x110] sm:$0xff] %v2547
      %2612 = vst [vmem:[#allocation6 + $0x118] sm:$0xff] %v2548
      %2613 = vst [vmem:[#allocation6 + $0x120] sm:$0xff] %v2549
      %2614 = vst [vmem:[#allocation6 + $0x128] sm:$0xff] %v2550
      %2615 = vst [vmem:[#allocation6 + $0x130] sm:$0xff] %v2551
      %2616 = vst [vmem:[#allocation6 + $0x138] sm:$0xff] %v2552
      %2617 = vst [vmem:[#allocation6 + $0x140] sm:$0xff] %v2553
      %2618 = vst [vmem:[#allocation6 + $0x148] sm:$0xff] %v2554
      %2619 = vst [vmem:[#allocation6 + $0x150] sm:$0xff] %v2555
      %2620 = vst [vmem:[#allocation6 + $0x158] sm:$0xff] %v2556
      %2621 = vst [vmem:[#allocation6 + $0x160] sm:$0xff] %v2557
      %2622 = vst [vmem:[#allocation6 + $0x168] sm:$0xff] %v2558
      %2623 = vst [vmem:[#allocation6 + $0x170] sm:$0xff] %v2559
      %2624 = vst [vmem:[#allocation6 + $0x178] sm:$0xff] %v2560
      %2625 = vst [vmem:[#allocation6 + $0x180] sm:$0xff] %v2561
      %2626 = vst [vmem:[#allocation6 + $0x188] sm:$0xff] %v2562
      %2627 = vst [vmem:[#allocation6 + $0x190] sm:$0xff] %v2563
      %2628 = vst [vmem:[#allocation6 + $0x198] sm:$0xff] %v2564
      %2629 = vst [vmem:[#allocation6 + $0x1a0] sm:$0xff] %v2565
      %2630 = vst [vmem:[#allocation6 + $0x1a8] sm:$0xff] %v2566
      %2631 = vst [vmem:[#allocation6 + $0x1b0] sm:$0xff] %v2567
      %2632 = vst [vmem:[#allocation6 + $0x1b8] sm:$0xff] %v2568
      %2633 = vst [vmem:[#allocation6 + $0x1c0] sm:$0xff] %v2569
      %2634 = vst [vmem:[#allocation6 + $0x1c8] sm:$0xff] %v2570
      %2635 = vst [vmem:[#allocation6 + $0x1d0] sm:$0xff] %v2571
      %2636 = vst [vmem:[#allocation6 + $0x1d8] sm:$0xff] %v2572
      %2637 = vst [vmem:[#allocation6 + $0x1e0] sm:$0xff] %v2573
      %2638 = vst [vmem:[#allocation6 + $0x1e8] sm:$0xff] %v2574
      %2639 = vst [vmem:[#allocation6 + $0x1f0] sm:$0xff] %v2575
      %2640 = vst [vmem:[#allocation6 + $0x1f8] sm:$0xff] %v2576
    $region29: #{tpu_custom_call.1} parent=1 // pred_fallthru
      _
    // Predicated region
    $region30: #{tpu_custom_call.1} parent=1 // pred_check
      _
    $region31: #{tpu_custom_call.1} parent=1 // pred_check_branch
      %2642 = sbr.rel (0) target = $region33
    $region32: #{tpu_custom_call.1} parent=1 // pred_region
      %2644 = vsyncadd [#allocation5], 0
      %s2645 = sshll.u32 [#allocation6], 4
      %s2646 = int_to_ptr.vmem [resolvable:$true] %s2645
      %s2647 = sshll.u32 %s4, 4
      %s2648 = int_to_ptr.hbm [resolvable:$true] %s2647
      %2653 = dma.vmem_to_hbm [thread:$0]  %s2646, 8192, %s2648, [#allocation5], 128, 128, 8
    $region33: #{tpu_custom_call.1} parent=1 // pred_fallthru
      _
    // Predicated region
    $region34: #{tpu_custom_call.1} parent=1 // pred_check
      _
    $region35: #{tpu_custom_call.1} parent=1 // pred_check_branch
      %2655 = sbr.rel (0) target = $region37
    $region36: #{tpu_custom_call.1} parent=1 // pred_region
      %2657 = dma.done [#allocation5], 8192
    $region37: #{tpu_custom_call.1} parent=1 // pred_fallthru
      _
    %2658 = vsyncpa [#allocation4], 1
    %2659 = vsyncpa [#allocation5], 1

</llo_original>
